<compile_context>
chip_gen: v7x
topology: tpu7x:2x2x1
jax: 0.10.0
libtpu: 0.0.40
codegen_flags: <defaults>
</compile_context>

<pallas_src>
import functools

import numpy as np

import jax
import jax.numpy as jnp
from jax import lax
from jax.experimental import pallas as pl
from jax.experimental.pallas import tpu as pltpu

STATE_SIZE = 32
ACTION_SIZE = 16
REWARD_SIZE = 8
HIDDEN_SIZE = 64
K_ITEMS = 8

LANES = 128                                    # lane width / padded feature dim
SAR = STATE_SIZE + REWARD_SIZE + ACTION_SIZE   # 56 (linear1 input width)
BIAS_LANE = LANES - 1                          # constant-1 lane of padded input rows
HID_OFF = HIDDEN_SIZE                          # hidden carry lives at lanes [64, 80)
GRU_ONE_LANE = HID_OFF + ACTION_SIZE           # 80: constant-1 lane of the GRU input row
B3_COL = HIDDEN_SIZE                           # constant-1 column of hid2 (carries b3)

# Fused GRU weight: 128-wide output, four disjoint 16-lane gate windows.
NH_OUT = HID_OFF   # 64:  W_hn h + b_hn  (already on the hidden lanes -> no roll)
NI_OUT = 48        #      W_in s + b_in
R_OUT = 80         #      r pre-activation
Z_OUT = 96         #      z pre-activation
ROLL_R = (HID_OFF - R_OUT) % LANES    # 112  (== -16 mod 128)
ROLL_NI = (HID_OFF - NI_OUT) % LANES  # 16
ROLL_Z = (HID_OFF - Z_OUT) % LANES    # 96   (== -32 mod 128)

# Packed bf16 weight slab rows (resident in VMEM for the whole call).
W1_ROW, WG_ROW, W2S_ROW, W2Y_ROW, W3_ROW = 0, 128, 256, 384, 512
SLAB_ROWS = 528    # 16-row aligned tail (bf16 sublane tile) for the w3 row

assert max(SAR, GRU_ONE_LANE + 1, B3_COL + 1) <= BIAS_LANE


# ----------------------------------------------------------------------------
# Kernel: one time-block (TB GRU steps) per grid iteration.
# ----------------------------------------------------------------------------
def dqn_rnn_kernel(state_ref, y_ref, h0_ref, slab_ref, adv_ref, hid_ref,
                   h_carry, s_scr, h_scr, *, t_valid, tb):
    b = pl.program_id(0)

    @pl.when(b == 0)
    def _init():
        h_carry[...] = h0_ref[...]        # hidden carry lives in a VMEM scratch

    lane = lax.broadcasted_iota(jnp.int32, (1, LANES), 1)
    hid_mask = (lane >= HID_OFF) & (lane < HID_OFF + ACTION_SIZE)

    # ---- prologue: recurrence-independent linear1+relu for the whole block ----
    w1 = slab_ref[W1_ROW:W1_ROW + LANES, :]                       # bf16 (128,128)
    state_blk = state_ref[...].reshape(tb, LANES).astype(jnp.bfloat16)
    s_scr[...] = jnp.maximum(
        jnp.dot(state_blk, w1, preferred_element_type=jnp.float32), 0.0)

    # ---- recurrent loop: one (1,128)x(128,128) bf16 matmul + gate math/step ----
    wgru = slab_ref[WG_ROW:WG_ROW + LANES, :]                     # bf16 (128,128)

    def step(i, h_prev):
        s_row = s_scr[pl.ds(i, 1), :]                             # (1,128) f32
        sh = (s_row + h_prev).astype(jnp.bfloat16)                # [s | h | 1]
        g = jnp.dot(sh, wgru, preferred_element_type=jnp.float32)  # (1,128) f32
        sg = jax.nn.sigmoid(g)
        r_al = pltpu.roll(sg, ROLL_R, axis=1)    # r         -> lanes [64,80)
        ni_al = pltpu.roll(g, ROLL_NI, axis=1)   # W_in s+b  -> lanes [64,80)
        z_al = pltpu.roll(sg, ROLL_Z, axis=1)    # z         -> lanes [64,80)
        n = jnp.tanh(r_al * g + ni_al)           # g holds W_hn h + b_hn at [64,80)
        h_full = (1.0 - z_al) * n + z_al * h_prev
        h_new = jnp.where(hid_mask, h_full, 0.0)                  # keep lanes clean
        h_next = jnp.where(b * tb + i < t_valid, h_new, h_prev)   # skip pad steps
        h_scr[pl.ds(i, 1), :] = h_next
        return h_next

    h_last = lax.fori_loop(0, tb, step, h_carry[...])
    h_carry[...] = h_last
    hid_ref[...] = h_last

    # ---- epilogue: batched linear2 + linear3 over the whole time block ----
    w2s = slab_ref[W2S_ROW:W2S_ROW + LANES, :]
    w2y = slab_ref[W2Y_ROW:W2Y_ROW + LANES, :]
    w3 = jnp.broadcast_to(
        slab_ref[W3_ROW:W3_ROW + 1, :].astype(jnp.float32), (tb, LANES))
    pre_s = jnp.dot(h_scr[...].astype(jnp.bfloat16), w2s,
                    preferred_element_type=jnp.float32)           # (tb,128)
    kcol = lax.broadcasted_iota(jnp.int32, (tb, K_ITEMS), 1)
    adv = jnp.zeros((tb, K_ITEMS), jnp.float32)
    for k in range(K_ITEMS):                                      # static, K=8
        y_k = y_ref[:, k, :].astype(jnp.bfloat16)                 # (tb,128)
        hid2_k = jnp.maximum(
            pre_s + jnp.dot(y_k, w2y, preferred_element_type=jnp.float32), 0.0)
        adv_k = jnp.sum(hid2_k * w3, axis=-1, keepdims=True)      # (tb,1); b3 via col 64
        adv = jnp.where(kcol == k, adv_k, adv)
    adv_ref[0] = adv                                              # one 4 KB store / block


# ----------------------------------------------------------------------------
# Host-side parameter creation (PyTorch layouts) and slab packing.
# ----------------------------------------------------------------------------
def make_params(key):
    """Synthetic parameters in native PyTorch nn.Linear / nn.GRU layouts."""
    S, A, R, H = STATE_SIZE, ACTION_SIZE, REWARD_SIZE, HIDDEN_SIZE
    ks = jax.random.split(key, 10)
    sc = 0.1
    w1 = sc * jax.random.normal(ks[0], (H, S + R + A), jnp.float32)   # linear1.weight
    b1 = sc * jax.random.normal(ks[1], (H,), jnp.float32)
    wih = sc * jax.random.normal(ks[2], (3 * A, H), jnp.float32)      # GRU weight_ih_l0
    whh = sc * jax.random.normal(ks[3], (3 * A, A), jnp.float32)      # GRU weight_hh_l0
    bih = sc * jax.random.normal(ks[4], (3 * A,), jnp.float32)
    bhh = sc * jax.random.normal(ks[5], (3 * A,), jnp.float32)
    w2 = sc * jax.random.normal(ks[6], (H, 2 * A), jnp.float32)       # linear2.weight
    b2 = sc * jax.random.normal(ks[7], (H,), jnp.float32)
    w3 = sc * jax.random.normal(ks[8], (1, H), jnp.float32)           # linear3.weight
    b3 = sc * jax.random.normal(ks[9], (1,), jnp.float32)
    return (w1, b1, wih, whh, bih, bhh, w2, b2, w3, b3)


def pack_params(params):
    """Pack all weights/biases into a single (528,128) bf16 slab."""
    (w1, b1, wih, whh, bih, bhh, w2, b2, w3, b3) = [
        np.asarray(p, np.float32) for p in params]
    A, H, F = ACTION_SIZE, HIDDEN_SIZE, LANES
    slab = np.zeros((SLAB_ROWS, F), np.float32)

    # linear1: contraction dim = padded 128-lane state row.  b1 folded via state
    # lane 127 == 1; the same row plants a 1.0 at lane GRU_ONE_LANE of s so the
    # fused GRU matmul below picks up all gate biases.
    blk = slab[W1_ROW:W1_ROW + F]
    blk[0:SAR, 0:H] = w1.T
    blk[BIAS_LANE, 0:H] = b1
    blk[BIAS_LANE, GRU_ONE_LANE] = 1.0

    # Fused 128-wide GRU weight.  Input row = [s | h | 1]; output gate windows:
    #   r -> [80,96), z -> [96,112), W_in s + b_in -> [48,64), W_hn h + b_hn -> [64,80).
    wg = slab[WG_ROW:WG_ROW + F]
    for gate, off in ((0, R_OUT), (1, Z_OUT)):                    # r, z
        wg[0:H, off:off + A] = wih[gate * A:(gate + 1) * A, :].T
        wg[HID_OFF:HID_OFF + A, off:off + A] = whh[gate * A:(gate + 1) * A, :].T
        wg[GRU_ONE_LANE, off:off + A] = (bih[gate * A:(gate + 1) * A]
                                         + bhh[gate * A:(gate + 1) * A])
    wg[0:H, NI_OUT:NI_OUT + A] = wih[2 * A:3 * A, :].T
    wg[GRU_ONE_LANE, NI_OUT:NI_OUT + A] = bih[2 * A:3 * A]
    wg[HID_OFF:HID_OFF + A, NH_OUT:NH_OUT + A] = whh[2 * A:3 * A, :].T
    wg[GRU_ONE_LANE, NH_OUT:NH_OUT + A] = bhh[2 * A:3 * A]

    # linear2, state half: hidden lanes [64,80) -> H outputs.
    blk = slab[W2S_ROW:W2S_ROW + F]
    blk[HID_OFF:HID_OFF + A, 0:H] = w2[:, 0:A].T

    # linear2, y half: b2 via y lane 127 == 1; the same lane writes 1.0 into
    # column B3_COL of hid2, which carries b3 through the linear3 reduction.
    blk = slab[W2Y_ROW:W2Y_ROW + F]
    blk[0:A, 0:H] = w2[:, A:2 * A].T
    blk[BIAS_LANE, 0:H] = b2
    blk[BIAS_LANE, B3_COL] = 1.0

    # linear3 row: weights in lanes [0,H), b3 at B3_COL.
    slab[W3_ROW, 0:H] = w3[0]
    slab[W3_ROW, B3_COL] = b3[0]

    # --- invariant checks (see review's correctness concerns) ---
    assert np.all(slab[W2S_ROW:W2S_ROW + F, B3_COL] == 0.0)        # b3 carrier stays 1.0
    col = slab[W2Y_ROW:W2Y_ROW + F, B3_COL]
    assert col[BIAS_LANE] == 1.0 and np.count_nonzero(col) == 1
    gate_cols = np.zeros(F, bool)
    for off in (R_OUT, Z_OUT, NI_OUT, NH_OUT):
        gate_cols[off:off + A] = True
    assert np.all(slab[WG_ROW:WG_ROW + F][:, ~gate_cols] == 0.0)   # g zero off-window
    used_rows = np.zeros(F, bool)
    used_rows[0:H] = True
    used_rows[HID_OFF:HID_OFF + A] = True
    used_rows[GRU_ONE_LANE] = True
    assert np.all(slab[WG_ROW:WG_ROW + F][~used_rows, :] == 0.0)
    assert np.all(slab[W1_ROW:W1_ROW + F, HID_OFF:HID_OFF + A] == 0.0)  # s hid-lanes == 0

    return jnp.asarray(slab, jnp.bfloat16)


# ----------------------------------------------------------------------------
# Wrappers.
# ----------------------------------------------------------------------------
def _round_up(x, m):
    return ((x + m - 1) // m) * m


def build_inputs(x_seq, y_seq, rew_seq, act_seq):
    """Pad per-step inputs to lane-dense 128-wide rows (with bias-1 lanes)."""
    T = x_seq.shape[0]
    S, A, R = STATE_SIZE, ACTION_SIZE, REWARD_SIZE
    state = jnp.zeros((T, 1, LANES), jnp.float32)
    state = state.at[:, 0, 0:S].set(x_seq)
    state = state.at[:, 0, S:S + R].set(rew_seq)
    state = state.at[:, 0, S + R:S + R + A].set(act_seq)
    state = state.at[:, 0, BIAS_LANE].set(1.0)
    ypad = jnp.zeros((T, K_ITEMS, LANES), jnp.float32)
    ypad = ypad.at[:, :, 0:A].set(y_seq)
    ypad = ypad.at[:, :, BIAS_LANE].set(1.0)
    return state, ypad


def dqn_rnn_forward_seq(state_pad, y_pad, h0_pad, slab, *, tb=128):
    """Run T recurrent steps, TB steps per grid iteration (single pallas_call)."""
    T = state_pad.shape[0]
    tb = min(_round_up(tb, 8), _round_up(T, 8))
    nb = (T + tb - 1) // tb
    t_pad = nb * tb
    if t_pad != T:                        # pad the time axis; padded steps are
        state_pad = jnp.pad(state_pad, ((0, t_pad - T), (0, 0), (0, 0)))
        y_pad = jnp.pad(y_pad, ((0, t_pad - T), (0, 0), (0, 0)))

    kernel = functools.partial(dqn_rnn_kernel, t_valid=T, tb=tb)
    adv, hid = pl.pallas_call(
        kernel,
        out_shape=(
            jax.ShapeDtypeStruct((nb, tb, K_ITEMS), jnp.float32),  # per-block advantage
            jax.ShapeDtypeStruct((1, LANES), jnp.float32),         # final GRU hidden (padded)
        ),
        grid=(nb,),
        in_specs=[
            pl.BlockSpec((tb, 1, LANES), lambda b: (b, 0, 0)),         # state block
            pl.BlockSpec((tb, K_ITEMS, LANES), lambda b: (b, 0, 0)),   # y block
            pl.BlockSpec((1, LANES), lambda b: (0, 0)),                # h0 (resident)
            pl.BlockSpec((SLAB_ROWS, LANES), lambda b: (0, 0)),        # weight slab (resident)
        ],
        out_specs=(
            pl.BlockSpec((1, tb, K_ITEMS), lambda b: (b, 0, 0)),
            pl.BlockSpec((1, LANES), lambda b: (0, 0)),
        ),
        scratch_shapes=[
            pltpu.VMEM((1, LANES), jnp.float32),     # hidden carry (persists across blocks)
            pltpu.VMEM((tb, LANES), jnp.float32),    # s = relu(linear1) for the block
            pltpu.VMEM((tb, LANES), jnp.float32),    # per-step hidden states for epilogue
        ],
        # The time axis is a recurrence -> "arbitrary".
        compiler_params=pltpu.CompilerParams(dimension_semantics=("arbitrary",)),
    )(state_pad, y_pad, h0_pad, slab)

    advantage = adv.reshape(nb * tb, K_ITEMS)[:T]            # (T, K)
    hidden = hid[:, HID_OFF:HID_OFF + ACTION_SIZE]           # (1, A)
    return advantage, hidden


def dqn_rnn_forward(x, y, prev_reward, prev_action, hidden, slab):
    """Mirrors DQN_rnn.forward (dual_rnn=False): a single step (T=1)."""
    state_pad, y_pad = build_inputs(
        x.reshape(1, STATE_SIZE),
        y.reshape(1, K_ITEMS, ACTION_SIZE),
        prev_reward.reshape(1, REWARD_SIZE),
        prev_action.reshape(1, ACTION_SIZE))
    h0_pad = jnp.zeros((1, LANES), jnp.float32).at[
        0, HID_OFF:HID_OFF + ACTION_SIZE].set(hidden.reshape(-1))
    adv, hid = dqn_rnn_forward_seq(state_pad, y_pad, h0_pad, slab, tb=8)
    return adv, hid.reshape(1, 1, ACTION_SIZE), None         # local_hidden unused


# ----------------------------------------------------------------------------
# Pure-JAX reference (faithful to the PyTorch module, one step, f32).
# ----------------------------------------------------------------------------
def reference_step(params, state_vec, y_ka, h):
    (w1, b1, wih, whh, bih, bhh, w2, b2, w3, b3) = params
    A = ACTION_SIZE
    s = jax.nn.relu(w1 @ state_vec + b1)                      # linear1 + relu
    gi = wih @ s + bih
    gh = whh @ h + bhh
    r = jax.nn.sigmoid(gi[0:A] + gh[0:A])
    z = jax.nn.sigmoid(gi[A:2 * A] + gh[A:2 * A])
    n = jnp.tanh(gi[2 * A:3 * A] + r * gh[2 * A:3 * A])
    h_new = (1.0 - z) * n + z * h                             # GRU cell
    cat = jnp.concatenate(
        [jnp.tile(h_new[None, :], (K_ITEMS, 1)), y_ka], axis=1)
    hid2 = jax.nn.relu(cat @ w2.T + b2)
    adv = hid2 @ w3[0] + b3[0]
    return adv, h_new


if __name__ == "__main__":
    key = jax.random.PRNGKey(0)
    ks = jax.random.split(key, 6)

    params = make_params(ks[0])
    slab = pack_params(params)

    T = 12
    x_seq = jax.random.normal(ks[1], (T, STATE_SIZE), jnp.float32)
    y_seq = jax.random.normal(ks[2], (T, K_ITEMS, ACTION_SIZE), jnp.float32)
    rew_seq = jax.random.normal(ks[3], (T, REWARD_SIZE), jnp.float32)
    act_seq = jax.random.normal(ks[4], (T, ACTION_SIZE), jnp.float32)
    h0 = jax.random.normal(ks[5], (ACTION_SIZE,), jnp.float32)

    state_pad, y_pad = build_inputs(x_seq, y_seq, rew_seq, act_seq)
    h0_pad = jnp.zeros((1, LANES), jnp.float32).at[
        0, HID_OFF:HID_OFF + ACTION_SIZE].set(h0)

    # Time-blocked call: T=12, TB=8 -> 2 grid blocks (second block half-padded).
    fwd = jax.jit(functools.partial(dqn_rnn_forward_seq, tb=8))
    adv_seq, hid_final = fwd(state_pad, y_pad, h0_pad, slab)
    jax.block_until_ready((adv_seq, hid_final))
    assert adv_seq.shape == (T, K_ITEMS)
    assert hid_final.shape == (1, ACTION_SIZE)

    # Reference = T repeated module forward calls with carried hidden (f32).
    h_ref = h0
    ref_advs = []
    for t in range(T):
        sv = jnp.concatenate([x_seq[t], rew_seq[t], act_seq[t]])
        a_ref, h_ref = reference_step(params, sv, y_seq[t], h_ref)
        ref_advs.append(a_ref)
    ref_adv = jnp.stack(ref_advs)

    # bf16 MXU operands (f32 elementwise) -> slightly wider tolerance.
    np.testing.assert_allclose(np.asarray(adv_seq), np.asarray(ref_adv),
                               rtol=3e-2, atol=3e-2)
    np.testing.assert_allclose(np.asarray(hid_final[0]), np.asarray(h_ref),
                               rtol=3e-2, atol=3e-2)

    # Single-step API matching the PyTorch forward signature/shapes.
    adv1, hid1, local_hidden = dqn_rnn_forward(
        x_seq[0].reshape(1, 1, STATE_SIZE),
        y_seq[0].reshape(1, K_ITEMS, ACTION_SIZE),
        rew_seq[0],
        act_seq[0].reshape(1, 1, ACTION_SIZE),
        h0.reshape(1, 1, ACTION_SIZE),
        slab)
    jax.block_until_ready((adv1, hid1))
    assert adv1.shape == (1, K_ITEMS)
    assert hid1.shape == (1, 1, ACTION_SIZE)
    np.testing.assert_allclose(np.asarray(adv1[0]), np.asarray(adv_seq[0]),
                               rtol=1e-3, atol=1e-3)

    print("KERNEL_OK")
</pallas_src>

<mosaic_0001>
module attributes {stable_mosaic.version = 11 : i64} {
  func.func @dqn_rnn_kernel(%arg0: i32, %arg1: memref<8x1x128xf32, #tpu.memory_space<vmem>>, %arg2: memref<8x8x128xf32, #tpu.memory_space<vmem>>, %arg3: memref<1x128xf32, #tpu.memory_space<vmem>>, %arg4: memref<528x128xbf16, #tpu.memory_space<vmem>>, %arg5: memref<1x8x8xf32, #tpu.memory_space<vmem>>, %arg6: memref<1x128xf32, #tpu.memory_space<vmem>>, %arg7: memref<1x128xf32, #tpu.memory_space<vmem>>, %arg8: memref<8x128xf32, #tpu.memory_space<vmem>>, %arg9: memref<8x128xf32, #tpu.memory_space<vmem>>) attributes {dimension_semantics = [#tpu.dimension_semantics<arbitrary>], iteration_bounds = array<i64: 2>, scalar_prefetch = 0 : i64, scratch_operands = 3 : i64, tpu.core_type = #tpu.core_type<tc>, window_params = [{transform_indices = @transform_0, window_bounds = array<i64: 8, 1, 128>}, {transform_indices = @transform_1, window_bounds = array<i64: 8, 8, 128>}, {pipeline_mode = #tpu.pipeline_mode<synchronous>, transform_indices = @transform_2, window_bounds = array<i64: 1, 128>}, {pipeline_mode = #tpu.pipeline_mode<synchronous>, transform_indices = @transform_3, window_bounds = array<i64: 528, 128>}, {transform_indices = @transform_4, window_bounds = array<i64: 1, 8, 8>}, {pipeline_mode = #tpu.pipeline_mode<synchronous>, transform_indices = @transform_5, window_bounds = array<i64: 1, 128>}]} {
    %c0_i32 = arith.constant 0 : i32
    %0 = arith.cmpi eq, %arg0, %c0_i32 : i32
    %1 = arith.extui %0 : i1 to i32
    %c0_i32_0 = arith.constant 0 : i32
    %2 = arith.cmpi ne, %1, %c0_i32_0 : i32
    scf.if %2 {
      %c0_70 = arith.constant 0 : index
      %c0_71 = arith.constant 0 : index
      %157 = vector.load %arg3[%c0_70, %c0_71] : memref<1x128xf32, #tpu.memory_space<vmem>>, vector<1x128xf32>
      %c0_72 = arith.constant 0 : index
      %c0_73 = arith.constant 0 : index
      %158 = vector.load %arg7[%c0_72, %c0_73] : memref<1x128xf32, #tpu.memory_space<vmem>>, vector<1x128xf32>
      tpu.vector_store %arg7[%c0_72, %c0_73], %157 {strides = array<i32>} : memref<1x128xf32, #tpu.memory_space<vmem>>, vector<1x128xf32>,
    } else {
    }
    %3 = tpu.iota {dimensions = array<i32: 1>} : vector<1x128xi32>
    %c64_i32 = arith.constant 64 : i32
    %4 = vector.broadcast %c64_i32 : i32 to vector<1x128xi32>
    %5 = arith.cmpi sge, %3, %4 : vector<1x128xi32>
    %c80_i32 = arith.constant 80 : i32
    %6 = vector.broadcast %c80_i32 : i32 to vector<1x128xi32>
    %7 = arith.cmpi slt, %3, %6 : vector<1x128xi32>
    %8 = arith.andi %5, %7 : vector<1x128xi1>
    %c0 = arith.constant 0 : index
    %c0_1 = arith.constant 0 : index
    %9 = vector.load %arg4[%c0, %c0_1] : memref<528x128xbf16, #tpu.memory_space<vmem>>, vector<128x128xbf16>
    %c0_2 = arith.constant 0 : index
    %c0_3 = arith.constant 0 : index
    %c0_4 = arith.constant 0 : index
    %10 = vector.load %arg1[%c0_2, %c0_3, %c0_4] : memref<8x1x128xf32, #tpu.memory_space<vmem>>, vector<8x1x128xf32>
    %11 = vector.shape_cast %10 : vector<8x1x128xf32> to vector<8x128xf32>
    %12 = arith.truncf %11 : vector<8x128xf32> to vector<8x128xbf16>
    %cst = arith.constant dense<0.000000e+00> : vector<8x128xf32>
    %13 = tpu.matmul %12, %9, %cst {dimension_numbers = #tpu.dot_dimension_numbers<[1], [0], [0], [1], [0, 0, 1, 1], [], []>} : vector<8x128xbf16>, vector<128x128xbf16>, vector<8x128xf32> -> vector<8x128xf32>
    %cst_5 = arith.constant 0.000000e+00 : f32
    %14 = vector.broadcast %cst_5 : f32 to vector<8x128xf32>
    %15 = arith.maximumf %13, %14 : vector<8x128xf32>
    %c0_6 = arith.constant 0 : index
    %c0_7 = arith.constant 0 : index
    %16 = vector.load %arg8[%c0_6, %c0_7] : memref<8x128xf32, #tpu.memory_space<vmem>>, vector<8x128xf32>
    tpu.vector_store %arg8[%c0_6, %c0_7], %15 {strides = array<i32>} : memref<8x128xf32, #tpu.memory_space<vmem>>, vector<8x128xf32>,
    %c128 = arith.constant 128 : index
    %c0_8 = arith.constant 0 : index
    %17 = vector.load %arg4[%c128, %c0_8] : memref<528x128xbf16, #tpu.memory_space<vmem>>, vector<128x128xbf16>
    %c0_9 = arith.constant 0 : index
    %c0_10 = arith.constant 0 : index
    %18 = vector.load %arg7[%c0_9, %c0_10] : memref<1x128xf32, #tpu.memory_space<vmem>>, vector<1x128xf32>
    %c0_i32_11 = arith.constant 0 : i32
    %c8_i32 = arith.constant 8 : i32
    %19 = arith.addi %c0_i32_11, %c8_i32 : i32
    %c1_i32 = arith.constant 1 : i32
    %20 = scf.for %arg10 = %c0_i32_11 to %19 step %c1_i32 iter_args(%arg11 = %18) -> (vector<1x128xf32>)  : i32 {
      %157 = arith.index_cast %arg10 : i32 to index
      %c0_70 = arith.constant 0 : index
      %158 = vector.load %arg8[%157, %c0_70] : memref<8x128xf32, #tpu.memory_space<vmem>>, vector<1x128xf32>
      %159 = arith.addf %158, %arg11 : vector<1x128xf32>
      %160 = arith.truncf %159 : vector<1x128xf32> to vector<1x128xbf16>
      %cst_71 = arith.constant dense<0.000000e+00> : vector<1x128xf32>
      %161 = tpu.matmul %160, %17, %cst_71 {dimension_numbers = #tpu.dot_dimension_numbers<[1], [0], [0], [1], [0, 0, 1, 1], [], []>} : vector<1x128xbf16>, vector<128x128xbf16>, vector<1x128xf32> -> vector<1x128xf32>
      %162 = arith.negf %161 : vector<1x128xf32>
      %163 = math.exp %162 : vector<1x128xf32>
      %cst_72 = arith.constant 1.000000e+00 : f32
      %164 = vector.broadcast %cst_72 : f32 to vector<1x128xf32>
      %165 = arith.addf %164, %163 : vector<1x128xf32>
      %166 = arith.divf %164, %165 : vector<1x128xf32>
      %c112_i32 = arith.constant 112 : i32
      %167 = tpu.dynamic_rotate %166 by %c112_i32 dim 1 : vector<1x128xf32>, i32 -> vector<1x128xf32>
      %c16_i32 = arith.constant 16 : i32
      %168 = tpu.dynamic_rotate %161 by %c16_i32 dim 1 : vector<1x128xf32>, i32 -> vector<1x128xf32>
      %c96_i32 = arith.constant 96 : i32
      %169 = tpu.dynamic_rotate %166 by %c96_i32 dim 1 : vector<1x128xf32>, i32 -> vector<1x128xf32>
      %170 = arith.mulf %167, %161 : vector<1x128xf32>
      %171 = arith.addf %170, %168 : vector<1x128xf32>
      %172 = math.tanh %171 : vector<1x128xf32>
      %cst_73 = arith.constant 1.000000e+00 : f32
      %173 = vector.broadcast %cst_73 : f32 to vector<1x128xf32>
      %174 = arith.subf %173, %169 : vector<1x128xf32>
      %175 = arith.mulf %174, %172 : vector<1x128xf32>
      %176 = arith.mulf %169, %arg11 : vector<1x128xf32>
      %177 = arith.addf %175, %176 : vector<1x128xf32>
      %cst_74 = arith.constant 0.000000e+00 : f32
      %178 = vector.broadcast %cst_74 : f32 to vector<1x128xf32>
      %179 = arith.select %8, %177, %178 : vector<1x128xi1>, vector<1x128xf32>
      %c8_i32_75 = arith.constant 8 : i32
      %180 = arith.muli %arg0, %c8_i32_75 : i32
      %181 = arith.addi %180, %arg10 : i32
      %c12_i32 = arith.constant 12 : i32
      %182 = arith.cmpi slt, %181, %c12_i32 : i32
      %183 = arith.select %182, %179, %arg11 : vector<1x128xf32>
      %184 = arith.index_cast %arg10 : i32 to index
      %c0_76 = arith.constant 0 : index
      %185 = vector.load %arg9[%184, %c0_76] : memref<8x128xf32, #tpu.memory_space<vmem>>, vector<1x128xf32>
      tpu.vector_store %arg9[%184, %c0_76], %183 {strides = array<i32>} : memref<8x128xf32, #tpu.memory_space<vmem>>, vector<1x128xf32>,
      scf.yield %183 : vector<1x128xf32>
    }
    %c8_i32_12 = arith.constant 8 : i32
    %c0_13 = arith.constant 0 : index
    %c0_14 = arith.constant 0 : index
    %21 = vector.load %arg7[%c0_13, %c0_14] : memref<1x128xf32, #tpu.memory_space<vmem>>, vector<1x128xf32>
    tpu.vector_store %arg7[%c0_13, %c0_14], %20 {strides = array<i32>} : memref<1x128xf32, #tpu.memory_space<vmem>>, vector<1x128xf32>,
    %c0_15 = arith.constant 0 : index
    %c0_16 = arith.constant 0 : index
    %22 = vector.load %arg6[%c0_15, %c0_16] : memref<1x128xf32, #tpu.memory_space<vmem>>, vector<1x128xf32>
    tpu.vector_store %arg6[%c0_15, %c0_16], %20 {strides = array<i32>} : memref<1x128xf32, #tpu.memory_space<vmem>>, vector<1x128xf32>,
    %c256 = arith.constant 256 : index
    %c0_17 = arith.constant 0 : index
    %23 = vector.load %arg4[%c256, %c0_17] : memref<528x128xbf16, #tpu.memory_space<vmem>>, vector<128x128xbf16>
    %c384 = arith.constant 384 : index
    %c0_18 = arith.constant 0 : index
    %24 = vector.load %arg4[%c384, %c0_18] : memref<528x128xbf16, #tpu.memory_space<vmem>>, vector<128x128xbf16>
    %c512 = arith.constant 512 : index
    %c0_19 = arith.constant 0 : index
    %25 = vector.load %arg4[%c512, %c0_19] : memref<528x128xbf16, #tpu.memory_space<vmem>>, vector<1x128xbf16>
    %26 = arith.extf %25 : vector<1x128xbf16> to vector<1x128xf32>
    %27 = vector.shape_cast %26 : vector<1x128xf32> to vector<1x128xf32>
    %28 = vector.broadcast %27 : vector<1x128xf32> to vector<8x128xf32>
    %c0_20 = arith.constant 0 : index
    %c0_21 = arith.constant 0 : index
    %29 = vector.load %arg9[%c0_20, %c0_21] : memref<8x128xf32, #tpu.memory_space<vmem>>, vector<8x128xf32>
    %30 = arith.truncf %29 : vector<8x128xf32> to vector<8x128xbf16>
    %cst_22 = arith.constant dense<0.000000e+00> : vector<8x128xf32>
    %31 = tpu.matmul %30, %23, %cst_22 {dimension_numbers = #tpu.dot_dimension_numbers<[1], [0], [0], [1], [0, 0, 1, 1], [], []>} : vector<8x128xbf16>, vector<128x128xbf16>, vector<8x128xf32> -> vector<8x128xf32>
    %32 = tpu.iota {dimensions = array<i32: 1>} : vector<8x8xi32>
    %cst_23 = arith.constant 0.000000e+00 : f32
    %33 = vector.broadcast %cst_23 : f32 to vector<8x8xf32>
    %c0_24 = arith.constant 0 : index
    %c0_25 = arith.constant 0 : index
    %c0_26 = arith.constant 0 : index
    %34 = vector.load %arg2[%c0_24, %c0_25, %c0_26] : memref<8x8x128xf32, #tpu.memory_space<vmem>>, vector<8x1x128xf32>
    %35 = vector.shape_cast %34 : vector<8x1x128xf32> to vector<8x128xf32>
    %36 = arith.truncf %35 : vector<8x128xf32> to vector<8x128xbf16>
    %cst_27 = arith.constant dense<0.000000e+00> : vector<8x128xf32>
    %37 = tpu.matmul %36, %24, %cst_27 {dimension_numbers = #tpu.dot_dimension_numbers<[1], [0], [0], [1], [0, 0, 1, 1], [], []>} : vector<8x128xbf16>, vector<128x128xbf16>, vector<8x128xf32> -> vector<8x128xf32>
    %38 = arith.addf %31, %37 : vector<8x128xf32>
    %cst_28 = arith.constant 0.000000e+00 : f32
    %39 = vector.broadcast %cst_28 : f32 to vector<8x128xf32>
    %40 = arith.maximumf %38, %39 : vector<8x128xf32>
    %41 = arith.mulf %40, %28 : vector<8x128xf32>
    %cst_29 = arith.constant dense<0.000000e+00> : vector<8xf32>
    %42 = vector.multi_reduction <add>, %41, %cst_29 [1] : vector<8x128xf32> to vector<8xf32>
    %43 = vector.shape_cast %42 : vector<8xf32> to vector<8x1xf32>
    %c0_i32_30 = arith.constant 0 : i32
    %44 = vector.broadcast %c0_i32_30 : i32 to vector<8x8xi32>
    %45 = arith.cmpi eq, %32, %44 : vector<8x8xi32>
    %46 = vector.shape_cast %43 : vector<8x1xf32> to vector<8x1xf32>
    %47 = vector.broadcast %46 : vector<8x1xf32> to vector<8x8xf32>
    %48 = arith.select %45, %47, %33 : vector<8x8xi1>, vector<8x8xf32>
    %c0_31 = arith.constant 0 : index
    %c1 = arith.constant 1 : index
    %c0_32 = arith.constant 0 : index
    %49 = vector.load %arg2[%c0_31, %c1, %c0_32] : memref<8x8x128xf32, #tpu.memory_space<vmem>>, vector<8x1x128xf32>
    %50 = vector.shape_cast %49 : vector<8x1x128xf32> to vector<8x128xf32>
    %51 = arith.truncf %50 : vector<8x128xf32> to vector<8x128xbf16>
    %cst_33 = arith.constant dense<0.000000e+00> : vector<8x128xf32>
    %52 = tpu.matmul %51, %24, %cst_33 {dimension_numbers = #tpu.dot_dimension_numbers<[1], [0], [0], [1], [0, 0, 1, 1], [], []>} : vector<8x128xbf16>, vector<128x128xbf16>, vector<8x128xf32> -> vector<8x128xf32>
    %53 = arith.addf %31, %52 : vector<8x128xf32>
    %cst_34 = arith.constant 0.000000e+00 : f32
    %54 = vector.broadcast %cst_34 : f32 to vector<8x128xf32>
    %55 = arith.maximumf %53, %54 : vector<8x128xf32>
    %56 = arith.mulf %55, %28 : vector<8x128xf32>
    %cst_35 = arith.constant dense<0.000000e+00> : vector<8xf32>
    %57 = vector.multi_reduction <add>, %56, %cst_35 [1] : vector<8x128xf32> to vector<8xf32>
    %58 = vector.shape_cast %57 : vector<8xf32> to vector<8x1xf32>
    %c1_i32_36 = arith.constant 1 : i32
    %59 = vector.broadcast %c1_i32_36 : i32 to vector<8x8xi32>
    %60 = arith.cmpi eq, %32, %59 : vector<8x8xi32>
    %61 = vector.shape_cast %58 : vector<8x1xf32> to vector<8x1xf32>
    %62 = vector.broadcast %61 : vector<8x1xf32> to vector<8x8xf32>
    %63 = arith.select %60, %62, %48 : vector<8x8xi1>, vector<8x8xf32>
    %c0_37 = arith.constant 0 : index
    %c2 = arith.constant 2 : index
    %c0_38 = arith.constant 0 : index
    %64 = vector.load %arg2[%c0_37, %c2, %c0_38] : memref<8x8x128xf32, #tpu.memory_space<vmem>>, vector<8x1x128xf32>
    %65 = vector.shape_cast %64 : vector<8x1x128xf32> to vector<8x128xf32>
    %66 = arith.truncf %65 : vector<8x128xf32> to vector<8x128xbf16>
    %cst_39 = arith.constant dense<0.000000e+00> : vector<8x128xf32>
    %67 = tpu.matmul %66, %24, %cst_39 {dimension_numbers = #tpu.dot_dimension_numbers<[1], [0], [0], [1], [0, 0, 1, 1], [], []>} : vector<8x128xbf16>, vector<128x128xbf16>, vector<8x128xf32> -> vector<8x128xf32>
    %68 = arith.addf %31, %67 : vector<8x128xf32>
    %cst_40 = arith.constant 0.000000e+00 : f32
    %69 = vector.broadcast %cst_40 : f32 to vector<8x128xf32>
    %70 = arith.maximumf %68, %69 : vector<8x128xf32>
    %71 = arith.mulf %70, %28 : vector<8x128xf32>
    %cst_41 = arith.constant dense<0.000000e+00> : vector<8xf32>
    %72 = vector.multi_reduction <add>, %71, %cst_41 [1] : vector<8x128xf32> to vector<8xf32>
    %73 = vector.shape_cast %72 : vector<8xf32> to vector<8x1xf32>
    %c2_i32 = arith.constant 2 : i32
    %74 = vector.broadcast %c2_i32 : i32 to vector<8x8xi32>
    %75 = arith.cmpi eq, %32, %74 : vector<8x8xi32>
    %76 = vector.shape_cast %73 : vector<8x1xf32> to vector<8x1xf32>
    %77 = vector.broadcast %76 : vector<8x1xf32> to vector<8x8xf32>
    %78 = arith.select %75, %77, %63 : vector<8x8xi1>, vector<8x8xf32>
    %c0_42 = arith.constant 0 : index
    %c3 = arith.constant 3 : index
    %c0_43 = arith.constant 0 : index
    %79 = vector.load %arg2[%c0_42, %c3, %c0_43] : memref<8x8x128xf32, #tpu.memory_space<vmem>>, vector<8x1x128xf32>
    %80 = vector.shape_cast %79 : vector<8x1x128xf32> to vector<8x128xf32>
    %81 = arith.truncf %80 : vector<8x128xf32> to vector<8x128xbf16>
    %cst_44 = arith.constant dense<0.000000e+00> : vector<8x128xf32>
    %82 = tpu.matmul %81, %24, %cst_44 {dimension_numbers = #tpu.dot_dimension_numbers<[1], [0], [0], [1], [0, 0, 1, 1], [], []>} : vector<8x128xbf16>, vector<128x128xbf16>, vector<8x128xf32> -> vector<8x128xf32>
    %83 = arith.addf %31, %82 : vector<8x128xf32>
    %cst_45 = arith.constant 0.000000e+00 : f32
    %84 = vector.broadcast %cst_45 : f32 to vector<8x128xf32>
    %85 = arith.maximumf %83, %84 : vector<8x128xf32>
    %86 = arith.mulf %85, %28 : vector<8x128xf32>
    %cst_46 = arith.constant dense<0.000000e+00> : vector<8xf32>
    %87 = vector.multi_reduction <add>, %86, %cst_46 [1] : vector<8x128xf32> to vector<8xf32>
    %88 = vector.shape_cast %87 : vector<8xf32> to vector<8x1xf32>
    %c3_i32 = arith.constant 3 : i32
    %89 = vector.broadcast %c3_i32 : i32 to vector<8x8xi32>
    %90 = arith.cmpi eq, %32, %89 : vector<8x8xi32>
    %91 = vector.shape_cast %88 : vector<8x1xf32> to vector<8x1xf32>
    %92 = vector.broadcast %91 : vector<8x1xf32> to vector<8x8xf32>
    %93 = arith.select %90, %92, %78 : vector<8x8xi1>, vector<8x8xf32>
    %c0_47 = arith.constant 0 : index
    %c4 = arith.constant 4 : index
    %c0_48 = arith.constant 0 : index
    %94 = vector.load %arg2[%c0_47, %c4, %c0_48] : memref<8x8x128xf32, #tpu.memory_space<vmem>>, vector<8x1x128xf32>
    %95 = vector.shape_cast %94 : vector<8x1x128xf32> to vector<8x128xf32>
    %96 = arith.truncf %95 : vector<8x128xf32> to vector<8x128xbf16>
    %cst_49 = arith.constant dense<0.000000e+00> : vector<8x128xf32>
    %97 = tpu.matmul %96, %24, %cst_49 {dimension_numbers = #tpu.dot_dimension_numbers<[1], [0], [0], [1], [0, 0, 1, 1], [], []>} : vector<8x128xbf16>, vector<128x128xbf16>, vector<8x128xf32> -> vector<8x128xf32>
    %98 = arith.addf %31, %97 : vector<8x128xf32>
    %cst_50 = arith.constant 0.000000e+00 : f32
    %99 = vector.broadcast %cst_50 : f32 to vector<8x128xf32>
    %100 = arith.maximumf %98, %99 : vector<8x128xf32>
    %101 = arith.mulf %100, %28 : vector<8x128xf32>
    %cst_51 = arith.constant dense<0.000000e+00> : vector<8xf32>
    %102 = vector.multi_reduction <add>, %101, %cst_51 [1] : vector<8x128xf32> to vector<8xf32>
    %103 = vector.shape_cast %102 : vector<8xf32> to vector<8x1xf32>
    %c4_i32 = arith.constant 4 : i32
    %104 = vector.broadcast %c4_i32 : i32 to vector<8x8xi32>
    %105 = arith.cmpi eq, %32, %104 : vector<8x8xi32>
    %106 = vector.shape_cast %103 : vector<8x1xf32> to vector<8x1xf32>
    %107 = vector.broadcast %106 : vector<8x1xf32> to vector<8x8xf32>
    %108 = arith.select %105, %107, %93 : vector<8x8xi1>, vector<8x8xf32>
    %c0_52 = arith.constant 0 : index
    %c5 = arith.constant 5 : index
    %c0_53 = arith.constant 0 : index
    %109 = vector.load %arg2[%c0_52, %c5, %c0_53] : memref<8x8x128xf32, #tpu.memory_space<vmem>>, vector<8x1x128xf32>
    %110 = vector.shape_cast %109 : vector<8x1x128xf32> to vector<8x128xf32>
    %111 = arith.truncf %110 : vector<8x128xf32> to vector<8x128xbf16>
    %cst_54 = arith.constant dense<0.000000e+00> : vector<8x128xf32>
    %112 = tpu.matmul %111, %24, %cst_54 {dimension_numbers = #tpu.dot_dimension_numbers<[1], [0], [0], [1], [0, 0, 1, 1], [], []>} : vector<8x128xbf16>, vector<128x128xbf16>, vector<8x128xf32> -> vector<8x128xf32>
    %113 = arith.addf %31, %112 : vector<8x128xf32>
    %cst_55 = arith.constant 0.000000e+00 : f32
    %114 = vector.broadcast %cst_55 : f32 to vector<8x128xf32>
    %115 = arith.maximumf %113, %114 : vector<8x128xf32>
    %116 = arith.mulf %115, %28 : vector<8x128xf32>
    %cst_56 = arith.constant dense<0.000000e+00> : vector<8xf32>
    %117 = vector.multi_reduction <add>, %116, %cst_56 [1] : vector<8x128xf32> to vector<8xf32>
    %118 = vector.shape_cast %117 : vector<8xf32> to vector<8x1xf32>
    %c5_i32 = arith.constant 5 : i32
    %119 = vector.broadcast %c5_i32 : i32 to vector<8x8xi32>
    %120 = arith.cmpi eq, %32, %119 : vector<8x8xi32>
    %121 = vector.shape_cast %118 : vector<8x1xf32> to vector<8x1xf32>
    %122 = vector.broadcast %121 : vector<8x1xf32> to vector<8x8xf32>
    %123 = arith.select %120, %122, %108 : vector<8x8xi1>, vector<8x8xf32>
    %c0_57 = arith.constant 0 : index
    %c6 = arith.constant 6 : index
    %c0_58 = arith.constant 0 : index
    %124 = vector.load %arg2[%c0_57, %c6, %c0_58] : memref<8x8x128xf32, #tpu.memory_space<vmem>>, vector<8x1x128xf32>
    %125 = vector.shape_cast %124 : vector<8x1x128xf32> to vector<8x128xf32>
    %126 = arith.truncf %125 : vector<8x128xf32> to vector<8x128xbf16>
    %cst_59 = arith.constant dense<0.000000e+00> : vector<8x128xf32>
    %127 = tpu.matmul %126, %24, %cst_59 {dimension_numbers = #tpu.dot_dimension_numbers<[1], [0], [0], [1], [0, 0, 1, 1], [], []>} : vector<8x128xbf16>, vector<128x128xbf16>, vector<8x128xf32> -> vector<8x128xf32>
    %128 = arith.addf %31, %127 : vector<8x128xf32>
    %cst_60 = arith.constant 0.000000e+00 : f32
    %129 = vector.broadcast %cst_60 : f32 to vector<8x128xf32>
    %130 = arith.maximumf %128, %129 : vector<8x128xf32>
    %131 = arith.mulf %130, %28 : vector<8x128xf32>
    %cst_61 = arith.constant dense<0.000000e+00> : vector<8xf32>
    %132 = vector.multi_reduction <add>, %131, %cst_61 [1] : vector<8x128xf32> to vector<8xf32>
    %133 = vector.shape_cast %132 : vector<8xf32> to vector<8x1xf32>
    %c6_i32 = arith.constant 6 : i32
    %134 = vector.broadcast %c6_i32 : i32 to vector<8x8xi32>
    %135 = arith.cmpi eq, %32, %134 : vector<8x8xi32>
    %136 = vector.shape_cast %133 : vector<8x1xf32> to vector<8x1xf32>
    %137 = vector.broadcast %136 : vector<8x1xf32> to vector<8x8xf32>
    %138 = arith.select %135, %137, %123 : vector<8x8xi1>, vector<8x8xf32>
    %c0_62 = arith.constant 0 : index
    %c7 = arith.constant 7 : index
    %c0_63 = arith.constant 0 : index
    %139 = vector.load %arg2[%c0_62, %c7, %c0_63] : memref<8x8x128xf32, #tpu.memory_space<vmem>>, vector<8x1x128xf32>
    %140 = vector.shape_cast %139 : vector<8x1x128xf32> to vector<8x128xf32>
    %141 = arith.truncf %140 : vector<8x128xf32> to vector<8x128xbf16>
    %cst_64 = arith.constant dense<0.000000e+00> : vector<8x128xf32>
    %142 = tpu.matmul %141, %24, %cst_64 {dimension_numbers = #tpu.dot_dimension_numbers<[1], [0], [0], [1], [0, 0, 1, 1], [], []>} : vector<8x128xbf16>, vector<128x128xbf16>, vector<8x128xf32> -> vector<8x128xf32>
    %143 = arith.addf %31, %142 : vector<8x128xf32>
    %cst_65 = arith.constant 0.000000e+00 : f32
    %144 = vector.broadcast %cst_65 : f32 to vector<8x128xf32>
    %145 = arith.maximumf %143, %144 : vector<8x128xf32>
    %146 = arith.mulf %145, %28 : vector<8x128xf32>
    %cst_66 = arith.constant dense<0.000000e+00> : vector<8xf32>
    %147 = vector.multi_reduction <add>, %146, %cst_66 [1] : vector<8x128xf32> to vector<8xf32>
    %148 = vector.shape_cast %147 : vector<8xf32> to vector<8x1xf32>
    %c7_i32 = arith.constant 7 : i32
    %149 = vector.broadcast %c7_i32 : i32 to vector<8x8xi32>
    %150 = arith.cmpi eq, %32, %149 : vector<8x8xi32>
    %151 = vector.shape_cast %148 : vector<8x1xf32> to vector<8x1xf32>
    %152 = vector.broadcast %151 : vector<8x1xf32> to vector<8x8xf32>
    %153 = arith.select %150, %152, %138 : vector<8x8xi1>, vector<8x8xf32>
    %c0_67 = arith.constant 0 : index
    %c0_68 = arith.constant 0 : index
    %c0_69 = arith.constant 0 : index
    %154 = vector.load %arg5[%c0_67, %c0_68, %c0_69] : memref<1x8x8xf32, #tpu.memory_space<vmem>>, vector<1x8x8xf32>
    %155 = vector.shape_cast %154 : vector<1x8x8xf32> to vector<8x8xf32>
    %156 = vector.shape_cast %153 : vector<8x8xf32> to vector<1x8x8xf32>
    tpu.vector_store %arg5[%c0_67, %c0_68, %c0_69], %156 {strides = array<i32>} : memref<1x8x8xf32, #tpu.memory_space<vmem>>, vector<1x8x8xf32>,
    return
  }
  func.func @transform_0(%arg0: i32) -> (i32, i32, i32) {
    %c0_i32 = arith.constant 0 : i32
    %c0_i32_0 = arith.constant 0 : i32
    %c0_i32_1 = arith.constant 0 : i32
    return %arg0, %c0_i32, %c0_i32_0 : i32, i32, i32
  }
  func.func @transform_1(%arg0: i32) -> (i32, i32, i32) {
    %c0_i32 = arith.constant 0 : i32
    %c0_i32_0 = arith.constant 0 : i32
    %c0_i32_1 = arith.constant 0 : i32
    return %arg0, %c0_i32, %c0_i32_0 : i32, i32, i32
  }
  func.func @transform_2(%arg0: i32) -> (i32, i32) {
    %c0_i32 = arith.constant 0 : i32
    %c0_i32_0 = arith.constant 0 : i32
    %c0_i32_1 = arith.constant 0 : i32
    return %c0_i32, %c0_i32_0 : i32, i32
  }
  func.func @transform_3(%arg0: i32) -> (i32, i32) {
    %c0_i32 = arith.constant 0 : i32
    %c0_i32_0 = arith.constant 0 : i32
    %c0_i32_1 = arith.constant 0 : i32
    return %c0_i32, %c0_i32_0 : i32, i32
  }
  func.func @transform_4(%arg0: i32) -> (i32, i32, i32) {
    %c0_i32 = arith.constant 0 : i32
    %c0_i32_0 = arith.constant 0 : i32
    %c0_i32_1 = arith.constant 0 : i32
    return %arg0, %c0_i32, %c0_i32_0 : i32, i32, i32
  }
  func.func @transform_5(%arg0: i32) -> (i32, i32) {
    %c0_i32 = arith.constant 0 : i32
    %c0_i32_0 = arith.constant 0 : i32
    %c0_i32_1 = arith.constant 0 : i32
    return %c0_i32, %c0_i32_0 : i32, i32
  }
}

</mosaic_0001>

<llo_original>
// kernel: dqn_rnn_forward_seq.1
$region0: #{dqn_rnn_forward_seq.1}
  #allocation0 [shape = 'u32[]', space=smem, size = 0x4, offset = 0x4, fixed_abs, tag = 'smem constant byte address 0x4 - core index']
  #allocation1 [shape = 'u32[144,128]{1,0:T(1,128)}', space=vmem, size = 0x12000, scoped, tag = 'internal scratch']
  #allocation2 [shape = 'f32[1,128]{1,0:T(1,128)}', space=vmem, size = 0x200, scoped, tag = 'scratch operand']
  #allocation3 [shape = 'f32[8,128]{1,0:T(8,128)}', space=vmem, size = 0x1000, scoped, tag = 'scratch operand']
  #allocation4 [shape = 'f32[8,128]{1,0:T(8,128)}', space=vmem, size = 0x1000, scoped, tag = 'scratch operand']
  %s0 = inlined_call_operand.vmem [shape: f32[16,1,128], index: 0, kind: input, shape index: {}]
  %s1 = inlined_call_operand.vmem [shape: f32[16,8,128], index: 1, kind: input, shape index: {}]
  %s2 = inlined_call_operand.vmem [shape: f32[1,128], index: 2, kind: input, shape index: {}]
  %s3 = inlined_call_operand.vmem [shape: bf16[528,128], index: 3, kind: input, shape index: {}]
  %s4 = inlined_call_operand.vmem [shape: f32[2,8,8], index: 4, kind: output, shape index: {0}]
  %s5 = inlined_call_operand.vmem [shape: f32[1,128], index: 5, kind: output, shape index: {1}]
  %6 = xla_tuple %s4, %s5
  %s7 = sld [smem:[#allocation0]]
  $region68: #{dqn_rnn_forward_seq.1} parent=0
    _
  %s9 = ssub.s32 1, %s7
  %s10 = scalar_select 0, %s9, %s7
  loop: start=0, step=1, limit=4
  $region2: #{dqn_rnn_forward_seq.1} parent=0 // loop_pre_header
    _
  $region3: #{dqn_rnn_forward_seq.1} parent=0 // loop_header
    %s12 = sphi 0, %s16
    %p13 = scmp.ge.s32.totalorder %s12, 4
    %s22 = sphi 0, %s24
    %s25 = sphi 0, %s22
    %s26 = sphi 0, %s25
    %s42 = sphi 0, %s26
    %s48 = sphi 0, %s50
    %s51 = sphi 0, %s48
    %s52 = sphi 0, %s51
    %s68 = sphi 0, %s52
    %s72 = sphi 0, %s72
    %s74 = sphi 0, %s72
    %s75 = sphi 0, %s74
    %s89 = sphi 0, %s75
    %s93 = sphi 0, %s93
    %s95 = sphi 0, %s93
    %s96 = sphi 0, %s95
    %s110 = sphi 0, %s96
    %s116 = sphi 0, %s118
    %s119 = sphi 0, %s116
    %s120 = sphi 0, %s119
    %s136 = sphi 0, %s120
    %s140 = sphi 0, %s140
    %s142 = sphi 0, %s140
    %s143 = sphi 0, %s142
    %s157 = sphi 0, %s143
  $region4: #{dqn_rnn_forward_seq.1} parent=0 // loop_header_branch
    %15 = sbr.rel (%p13) target = $region8
  $region5: #{dqn_rnn_forward_seq.1} parent=0 // loop_body
    %s17 = ssub.s32 %s12, 1
    %s18 = ssub.s32 %s12, 2
    %s19 = sadd.s32 %s12, 1
    %s20 = ssub.s32 %s12, %s19
    %p21 = scmp.eq.s32.totalorder %s20, 0
    %s23 = sadd.s32 %s22, 1
    %s24 = scalar_select %p21, %s22, %s23
    %p27 = pneg %p21
    %p28 = scmp.eq.s32.totalorder %s12, 1
    %p29 = por %p27, %p28
    %p30 = scmp.ne.s32.totalorder %s22, %s25
    %p31 = scmp.eq.s32.totalorder %s12, 0
    %p32 = por %p30, %p31
    %p33 = scmp.ne.s32.totalorder %s22, %s25
    %p34 = scmp.eq.s32.totalorder %s17, 1
    %p35 = por %p33, %p34
    %p36 = scmp.ne.s32.totalorder %s25, %s26
    %p37 = scmp.eq.s32.totalorder %s17, 0
    %p38 = por %p36, %p37
    %p39 = scmp.ne.s32.totalorder %s25, %s26
    %p40 = scmp.eq.s32.totalorder %s18, 1
    %p41 = por %p39, %p40
    %p43 = scmp.ne.s32.totalorder %s26, %s42
    %p44 = scmp.eq.s32.totalorder %s18, 0
    %p45 = por %p43, %p44
    %s46 = ssub.s32 %s12, %s19
    %p47 = scmp.eq.s32.totalorder %s46, 0
    %s49 = sadd.s32 %s48, 1
    %s50 = scalar_select %p47, %s48, %s49
    %p53 = pneg %p47
    %p54 = scmp.eq.s32.totalorder %s12, 1
    %p55 = por %p53, %p54
    %p56 = scmp.ne.s32.totalorder %s48, %s51
    %p57 = scmp.eq.s32.totalorder %s12, 0
    %p58 = por %p56, %p57
    %p59 = scmp.ne.s32.totalorder %s48, %s51
    %p60 = scmp.eq.s32.totalorder %s17, 1
    %p61 = por %p59, %p60
    %p62 = scmp.ne.s32.totalorder %s51, %s52
    %p63 = scmp.eq.s32.totalorder %s17, 0
    %p64 = por %p62, %p63
    %p65 = scmp.ne.s32.totalorder %s51, %s52
    %p66 = scmp.eq.s32.totalorder %s18, 1
    %p67 = por %p65, %p66
    %p69 = scmp.ne.s32.totalorder %s52, %s68
    %p70 = scmp.eq.s32.totalorder %s18, 0
    %p71 = por %p69, %p70
    %s73 = sadd.s32 %s72, 1
    %p76 = scmp.eq.s32.totalorder %s12, 1
    %p77 = scmp.ne.s32.totalorder %s72, %s74
    %p78 = scmp.eq.s32.totalorder %s12, 0
    %p79 = por %p77, %p78
    %p80 = scmp.ne.s32.totalorder %s72, %s74
    %p81 = scmp.eq.s32.totalorder %s17, 1
    %p82 = por %p80, %p81
    %p83 = scmp.ne.s32.totalorder %s74, %s75
    %p84 = scmp.eq.s32.totalorder %s17, 0
    %p85 = por %p83, %p84
    %p86 = scmp.ne.s32.totalorder %s74, %s75
    %p87 = scmp.eq.s32.totalorder %s18, 1
    %p88 = por %p86, %p87
    %p90 = scmp.ne.s32.totalorder %s75, %s89
    %p91 = scmp.eq.s32.totalorder %s18, 0
    %p92 = por %p90, %p91
    %s94 = sadd.s32 %s93, 1
    %p97 = scmp.eq.s32.totalorder %s12, 1
    %p98 = scmp.ne.s32.totalorder %s93, %s95
    %p99 = scmp.eq.s32.totalorder %s12, 0
    %p100 = por %p98, %p99
    %p101 = scmp.ne.s32.totalorder %s93, %s95
    %p102 = scmp.eq.s32.totalorder %s17, 1
    %p103 = por %p101, %p102
    %p104 = scmp.ne.s32.totalorder %s95, %s96
    %p105 = scmp.eq.s32.totalorder %s17, 0
    %p106 = por %p104, %p105
    %p107 = scmp.ne.s32.totalorder %s95, %s96
    %p108 = scmp.eq.s32.totalorder %s18, 1
    %p109 = por %p107, %p108
    %p111 = scmp.ne.s32.totalorder %s96, %s110
    %p112 = scmp.eq.s32.totalorder %s18, 0
    %p113 = por %p111, %p112
    %s114 = ssub.s32 %s12, %s19
    %p115 = scmp.eq.s32.totalorder %s114, 0
    %s117 = sadd.s32 %s116, 1
    %s118 = scalar_select %p115, %s116, %s117
    %p121 = pneg %p115
    %p122 = scmp.eq.s32.totalorder %s12, 1
    %p123 = por %p121, %p122
    %p124 = scmp.ne.s32.totalorder %s116, %s119
    %p125 = scmp.eq.s32.totalorder %s12, 0
    %p126 = por %p124, %p125
    %p127 = scmp.ne.s32.totalorder %s116, %s119
    %p128 = scmp.eq.s32.totalorder %s17, 1
    %p129 = por %p127, %p128
    %p130 = scmp.ne.s32.totalorder %s119, %s120
    %p131 = scmp.eq.s32.totalorder %s17, 0
    %p132 = por %p130, %p131
    %p133 = scmp.ne.s32.totalorder %s119, %s120
    %p134 = scmp.eq.s32.totalorder %s18, 1
    %p135 = por %p133, %p134
    %p137 = scmp.ne.s32.totalorder %s120, %s136
    %p138 = scmp.eq.s32.totalorder %s18, 0
    %p139 = por %p137, %p138
    %s141 = sadd.s32 %s140, 1
    %p144 = scmp.eq.s32.totalorder %s12, 1
    %p145 = scmp.ne.s32.totalorder %s140, %s142
    %p146 = scmp.eq.s32.totalorder %s12, 0
    %p147 = por %p145, %p146
    %p148 = scmp.ne.s32.totalorder %s140, %s142
    %p149 = scmp.eq.s32.totalorder %s17, 1
    %p150 = por %p148, %p149
    %p151 = scmp.ne.s32.totalorder %s142, %s143
    %p152 = scmp.eq.s32.totalorder %s17, 0
    %p153 = por %p151, %p152
    %p154 = scmp.ne.s32.totalorder %s142, %s143
    %p155 = scmp.eq.s32.totalorder %s18, 1
    %p156 = por %p154, %p155
    %p158 = scmp.ne.s32.totalorder %s143, %s157
    %p159 = scmp.eq.s32.totalorder %s18, 0
    %p160 = por %p158, %p159
    %p161 = scmp.le.s32.totalorder 1, %s12
    %p162 = scmp.lt.s32.totalorder %s12, 3
    %p163 = pnand %p161, %p162
    %p164 = pneg %p163
    // Predicated region
    $region9: #{dqn_rnn_forward_seq.1} parent=5 // pred_check
      _
    $region10: #{dqn_rnn_forward_seq.1} parent=5 // pred_check_branch
      %166 = sbr.rel (%p163) target = $region12
    $region11: #{dqn_rnn_forward_seq.1} parent=5 // pred_region
      %s167 = ssub.s32 %s12, 1
      // Predicated region
      $region13: #{dqn_rnn_forward_seq.1} parent=11 // pred_check
        %p168 = pneg %p85
      $region14: #{dqn_rnn_forward_seq.1} parent=11 // pred_check_branch
        %170 = sbr.rel (%p168) target = $region16
      $region15: #{dqn_rnn_forward_seq.1} parent=11 // pred_region
        _
      $region16: #{dqn_rnn_forward_seq.1} parent=11 // pred_fallthru
        _
      // Predicated region
      $region17: #{dqn_rnn_forward_seq.1} parent=11 // pred_check
        %p171 = pneg %p106
      $region18: #{dqn_rnn_forward_seq.1} parent=11 // pred_check_branch
        %173 = sbr.rel (%p171) target = $region20
      $region19: #{dqn_rnn_forward_seq.1} parent=11 // pred_region
        _
      $region20: #{dqn_rnn_forward_seq.1} parent=11 // pred_fallthru
        _
    $region12: #{dqn_rnn_forward_seq.1} parent=5 // pred_fallthru
      _
    %p174 = scmp.lt.s32.totalorder %s12, 2
    // Predicated region
    $region21: #{dqn_rnn_forward_seq.1} parent=5 // pred_check
      %p175 = pneg %p174
    $region22: #{dqn_rnn_forward_seq.1} parent=5 // pred_check_branch
      %177 = sbr.rel (%p175) target = $region24
    $region23: #{dqn_rnn_forward_seq.1} parent=5 // pred_region
      // Predicated region
      $region25: #{dqn_rnn_forward_seq.1} parent=23 // pred_check
        %p178 = pneg %p32
      $region26: #{dqn_rnn_forward_seq.1} parent=23 // pred_check_branch
        %180 = sbr.rel (%p178) target = $region28
      $region27: #{dqn_rnn_forward_seq.1} parent=23 // pred_region
        %s181 = smul.u32 8, %s12
        %p182 = scmp.lt.s32.totalorder %s181, 15
        %s183 = scalar_select %p182, %s181, 15
        %s184 = scalar_lea.vmem %s0, %s183
        %s185 = smul.u32 8, %s12
      $region28: #{dqn_rnn_forward_seq.1} parent=23 // pred_fallthru
        _
      // Predicated region
      $region29: #{dqn_rnn_forward_seq.1} parent=23 // pred_check
        %p186 = pneg %p58
      $region30: #{dqn_rnn_forward_seq.1} parent=23 // pred_check_branch
        %188 = sbr.rel (%p186) target = $region32
      $region31: #{dqn_rnn_forward_seq.1} parent=23 // pred_region
        %s189 = smul.u32 8, %s12
        %p190 = scmp.lt.s32.totalorder %s189, 15
        %s191 = scalar_select %p190, %s189, 15
        %s192 = smul.addr %s191, 8
        %s193 = scalar_lea.vmem %s1, %s192
        %s194 = smul.u32 8, %s12
      $region32: #{dqn_rnn_forward_seq.1} parent=23 // pred_fallthru
        _
    $region24: #{dqn_rnn_forward_seq.1} parent=5 // pred_fallthru
      _
    %p195 = scmp.le.s32.totalorder 1, %s12
    %p196 = scmp.lt.s32.totalorder %s12, 3
    %p197 = pnand %p195, %p196
    %p198 = pneg %p197
    // Predicated region
    $region33: #{dqn_rnn_forward_seq.1} parent=5 // pred_check
      _
    $region34: #{dqn_rnn_forward_seq.1} parent=5 // pred_check_branch
      %200 = sbr.rel (%p197) target = $region36
    $region35: #{dqn_rnn_forward_seq.1} parent=5 // pred_region
      %s201 = ssub.s32 %s12, 1
      %s202 = smul.u32 8, %s17
      %p203 = scmp.lt.s32.totalorder %s202, 15
      %s204 = scalar_select %p203, %s202, 15
      %s205 = scalar_lea.vmem %s0, %s204
      %p206 = pneg %p38
      %p207 = pneg %p35
      %s208 = smul.u32 8, %s17
      %p209 = scmp.lt.s32.totalorder %s208, 15
      %s210 = scalar_select %p209, %s208, 15
      %s211 = smul.addr %s210, 8
      %s212 = scalar_lea.vmem %s1, %s211
      %p213 = pneg %p64
      %p214 = pneg %p61
      %p215 = pneg %p85
      %p216 = pneg %p82
      %p217 = pneg %p106
      %p218 = pneg %p103
      %p219 = pneg %p132
      %p220 = pneg %p129
      %p221 = scmp.lt.s32.totalorder %s17, 1
      %s222 = scalar_select %p221, %s17, 1
      %s223 = smul.addr %s222, 8
      %s224 = scalar_lea.vmem %s4, %s223
      %p225 = pneg %p153
      %p226 = pneg %p150
      %s227 = smul.u32 8, %s17
      %p228 = scmp.lt.s32.totalorder %s227, 15
      %s229 = scalar_select %p228, %s227, 15
      %s230 = scalar_lea.vmem %s0, %s229
      %s231 = smul.u32 8, %s17
      %s232 = smul.u32 8, %s17
      %p233 = scmp.lt.s32.totalorder %s232, 15
      %s234 = scalar_select %p233, %s232, 15
      %s235 = smul.addr %s234, 8
      %s236 = scalar_lea.vmem %s1, %s235
      %s237 = smul.u32 8, %s17
      %p238 = scmp.lt.s32.totalorder %s17, 1
      %s239 = scalar_select %p238, %s17, 1
      %s240 = smul.addr %s239, 8
      %s241 = scalar_lea.vmem %s4, %s240
      %p243 = scmp.eq.s32.totalorder %s17, 0
      // Predicated region
      $region37: #{dqn_rnn_forward_seq.1} parent=35 // pred_check
        %p244 = pneg %p243
      $region38: #{dqn_rnn_forward_seq.1} parent=35 // pred_check_branch
        %246 = sbr.rel (%p244) target = $region40
      $region39: #{dqn_rnn_forward_seq.1} parent=35 // pred_region
        %v247 = vld [vmem:[%s2] sm:$0x1]
        %248 = vst [vmem:[#allocation2] sm:$0x1] %v247
      $region40: #{dqn_rnn_forward_seq.1} parent=35 // pred_fallthru
        _
      %v249 = vlaneseq
      %v250 = vand.u32 %v249, 127
      %vm251 = vcmp.ge.s32.totalorder %v250, 64
      %vm252 = vcmp.lt.s32.totalorder %v250, 80
      %vm253 = vmand %vm251, %vm252
      %v254 = vld [vmem:[%s3] sm:$0xf]
      %v255 = vld [vmem:[%s3 + $0x4] sm:$0xf]
      %v256 = vld [vmem:[%s3 + $0x8] sm:$0xf]
      %v257 = vld [vmem:[%s3 + $0xc] sm:$0xf]
      %v258 = vld [vmem:[%s3 + $0x10] sm:$0xf]
      %v259 = vld [vmem:[%s3 + $0x14] sm:$0xf]
      %v260 = vld [vmem:[%s3 + $0x18] sm:$0xf]
      %v261 = vld [vmem:[%s3 + $0x1c] sm:$0xf]
      %v262 = vld [vmem:[%s3 + $0x20] sm:$0xf]
      %v263 = vld [vmem:[%s3 + $0x24] sm:$0xf]
      %v264 = vld [vmem:[%s3 + $0x28] sm:$0xf]
      %v265 = vld [vmem:[%s3 + $0x2c] sm:$0xf]
      %v266 = vld [vmem:[%s3 + $0x30] sm:$0xf]
      %v267 = vld [vmem:[%s3 + $0x34] sm:$0xf]
      %v268 = vld [vmem:[%s3 + $0x38] sm:$0xf]
      %v269 = vld [vmem:[%s3 + $0x3c] sm:$0xf]
      %v270 = vld [vmem:[%s230] sm:$0x1]
      %v271 = vld [vmem:[%s230 + $0x1] sm:$0x1]
      %v272 = vld [vmem:[%s230 + $0x2] sm:$0x1]
      %v273 = vld [vmem:[%s230 + $0x3] sm:$0x1]
      %v274 = vld [vmem:[%s230 + $0x4] sm:$0x1]
      %v275 = vld [vmem:[%s230 + $0x5] sm:$0x1]
      %v276 = vld [vmem:[%s230 + $0x6] sm:$0x1]
      %v277 = vld [vmem:[%s230 + $0x7] sm:$0x1]
      %v278 = vpack.c.bf16 %v270, %v270
      %v279 = vpack.c.bf16 %v271, %v271
      %v280 = vpack.c.bf16 %v272, %v272
      %v281 = vpack.c.bf16 %v273, %v273
      %v282 = vpack.c.bf16 %v274, %v274
      %v283 = vpack.c.bf16 %v275, %v275
      %v284 = vpack.c.bf16 %v276, %v276
      %v285 = vpack.c.bf16 %v277, %v277
      %v294 = vunpack.c.l.b16 %v278
      %v295 = vunpack.c.l.b16 %v279
      %v296 = vunpack.c.l.b16 %v280
      %v297 = vunpack.c.l.b16 %v281
      %v298 = vunpack.c.l.b16 %v282
      %v299 = vunpack.c.l.b16 %v283
      %v300 = vunpack.c.l.b16 %v284
      %v301 = vunpack.c.l.b16 %v285
      %v302 = vrot.slane %v295, 7
      %vm303 = vcmask 1041409
      %v304 = vsel %vm303, %v302, %v294
      %v305 = vrot.slane %v296, 6
      %vm306 = vcmask 1042434
      %v307 = vsel %vm306, %v305, %v304
      %v308 = vrot.slane %v297, 5
      %vm309 = vcmask 1043459
      %v310 = vsel %vm309, %v308, %v307
      %v311 = vrot.slane %v298, 4
      %vm312 = vcmask 1044484
      %v313 = vsel %vm312, %v311, %v310
      %v314 = vrot.slane %v299, 3
      %vm315 = vcmask 1045509
      %v316 = vsel %vm315, %v314, %v313
      %v317 = vrot.slane %v300, 2
      %vm318 = vcmask 1046534
      %v319 = vsel %vm318, %v317, %v316
      %v320 = vrot.slane %v301, 1
      %vm321 = vcmask 1047559
      %v322 = vsel %vm321, %v320, %v319
      %v323 = vpack.c.b16 %v322, %v322
      %v341 = vunpack.c.l.b16 %v254
      %v342 = vunpack.c.l.b16 %v255
      %v343 = vunpack.c.l.b16 %v256
      %v344 = vunpack.c.l.b16 %v257
      %v345 = vunpack.c.l.b16 %v258
      %v346 = vunpack.c.l.b16 %v259
      %v347 = vunpack.c.l.b16 %v260
      %v348 = vunpack.c.l.b16 %v261
      %v349 = vunpack.c.l.b16 %v262
      %v350 = vunpack.c.l.b16 %v263
      %v351 = vunpack.c.l.b16 %v264
      %v352 = vunpack.c.l.b16 %v265
      %v353 = vunpack.c.l.b16 %v266
      %v354 = vunpack.c.l.b16 %v267
      %v355 = vunpack.c.l.b16 %v268
      %v356 = vunpack.c.l.b16 %v269
      %v357 = vpack.c.b16 %v342, %v341
      %v358 = vpack.c.b16 %v344, %v343
      %v359 = vpack.c.b16 %v346, %v345
      %v360 = vpack.c.b16 %v348, %v347
      %v361 = vpack.c.b16 %v350, %v349
      %v362 = vpack.c.b16 %v352, %v351
      %v363 = vpack.c.b16 %v354, %v353
      %v364 = vpack.c.b16 %v356, %v355
      %373 = vmatprep.subr.bf16.mxu0 0
      %374 = vmatpush1.bf16.msra.mxu0 %v357
      %375 = vmatprep.subr.bf16.mxu0 0
      %376 = vmatpush1.bf16.msra.mxu0 %v358
      %377 = vmatprep.subr.bf16.mxu0 0
      %378 = vmatpush1.bf16.msra.mxu0 %v359
      %379 = vmatprep.subr.bf16.mxu0 0
      %380 = vmatpush1.bf16.msra.mxu0 %v360
      %381 = vmatprep.subr.bf16.mxu0 0
      %382 = vmatpush1.bf16.msra.mxu0 %v361
      %383 = vmatprep.subr.bf16.mxu0 0
      %384 = vmatpush1.bf16.msra.mxu0 %v362
      %385 = vmatprep.subr.bf16.mxu0 0
      %386 = vmatpush1.bf16.msra.mxu0 %v363
      %387 = vmatprep.subr.bf16.mxu0 0
      %388 = vmatpush1.bf16.msra.mxu0 %v364
      %389 = vmatprep.subr.bf16.mxu0 0
      %390 = vmatpush1.bf16.msra.mxu0 0
      %391 = vmatprep.subr.bf16.mxu0 0
      %392 = vmatpush1.bf16.msra.mxu0 0
      %393 = vmatprep.subr.bf16.mxu0 0
      %394 = vmatpush1.bf16.msra.mxu0 0
      %395 = vmatprep.subr.bf16.mxu0 0
      %396 = vmatpush1.bf16.msra.mxu0 0
      %397 = vmatprep.subr.bf16.mxu0 0
      %398 = vmatpush1.bf16.msra.mxu0 0
      %399 = vmatprep.subr.bf16.mxu0 0
      %400 = vmatpush1.bf16.msra.mxu0 0
      %401 = vmatprep.subr.bf16.mxu0 0
      %402 = vmatpush1.bf16.msra.mxu0 0
      %403 = vmatprep.subr.bf16.mxu0 0
      %404 = vmatpush1.bf16.msra.mxu0 0
      %405 = vmatprep.mubr.bf16.mxu0 0
      %406 = vmatmul.mubr.bf16.gmra.mrb[0].mxu0 %v323
      %v407 = vpop.f32.mrb[0].mxu0
      %v408 = vadd.f32 0.0, %v407
      %v409 = vpop.f32.mrb[0].mxu0
      %v410 = vpop.f32.mrb[0].mxu0
      %v411 = vpop.f32.mrb[0].mxu0
      %412 = vdwg.mxu0
      %v413 = vmax.f32 %v408, 0.0
      %414 = vst [vmem:[#allocation3] sm:$0xff] %v413
      %v415 = vld [vmem:[%s3 + $0x40] sm:$0xf]
      %v416 = vld [vmem:[%s3 + $0x44] sm:$0xf]
      %v417 = vld [vmem:[%s3 + $0x48] sm:$0xf]
      %v418 = vld [vmem:[%s3 + $0x4c] sm:$0xf]
      %v419 = vld [vmem:[%s3 + $0x50] sm:$0xf]
      %v420 = vld [vmem:[%s3 + $0x54] sm:$0xf]
      %v421 = vld [vmem:[%s3 + $0x58] sm:$0xf]
      %v422 = vld [vmem:[%s3 + $0x5c] sm:$0xf]
      %v423 = vld [vmem:[%s3 + $0x60] sm:$0xf]
      %v424 = vld [vmem:[%s3 + $0x64] sm:$0xf]
      %v425 = vld [vmem:[%s3 + $0x68] sm:$0xf]
      %v426 = vld [vmem:[%s3 + $0x6c] sm:$0xf]
      %v427 = vld [vmem:[%s3 + $0x70] sm:$0xf]
      %v428 = vld [vmem:[%s3 + $0x74] sm:$0xf]
      %v429 = vld [vmem:[%s3 + $0x78] sm:$0xf]
      %v430 = vld [vmem:[%s3 + $0x7c] sm:$0xf]
      %v431 = vld [vmem:[#allocation2] sm:$0x1]
      loop: start=0, step=1, limit=8
      $region41: #{dqn_rnn_forward_seq.1} parent=35 // loop_pre_header
        _
      $region42: #{dqn_rnn_forward_seq.1} parent=35 // loop_header
        %s433 = sphi 0, %s437
        %p434 = scmp.ge.s32.totalorder %s433, 8
        %v438 = vphi %v431, %v557
      $region43: #{dqn_rnn_forward_seq.1} parent=35 // loop_header_branch
        %436 = sbr.rel (%p434) target = $region47
      $region44: #{dqn_rnn_forward_seq.1} parent=35 // loop_body
        %s439 = scalar_lea.vmem [#allocation3], %s433
        %v440 = vld [vmem:[%s439] sm:$0x1]
        %v441 = vadd.f32 %v440, %v438
        %v442 = vpack.c.bf16 %v441, %v441
        %v459 = vunpack.c.l.b16 %v415
        %v460 = vunpack.c.l.b16 %v416
        %v461 = vunpack.c.l.b16 %v417
        %v462 = vunpack.c.l.b16 %v418
        %v463 = vunpack.c.l.b16 %v419
        %v464 = vunpack.c.l.b16 %v420
        %v465 = vunpack.c.l.b16 %v421
        %v466 = vunpack.c.l.b16 %v422
        %v467 = vunpack.c.l.b16 %v423
        %v468 = vunpack.c.l.b16 %v424
        %v469 = vunpack.c.l.b16 %v425
        %v470 = vunpack.c.l.b16 %v426
        %v471 = vunpack.c.l.b16 %v427
        %v472 = vunpack.c.l.b16 %v428
        %v473 = vunpack.c.l.b16 %v429
        %v474 = vunpack.c.l.b16 %v430
        %v475 = vpack.c.b16 %v460, %v459
        %v476 = vpack.c.b16 %v462, %v461
        %v477 = vpack.c.b16 %v464, %v463
        %v478 = vpack.c.b16 %v466, %v465
        %v479 = vpack.c.b16 %v468, %v467
        %v480 = vpack.c.b16 %v470, %v469
        %v481 = vpack.c.b16 %v472, %v471
        %v482 = vpack.c.b16 %v474, %v473
        %491 = vmatprep.subr.bf16.mxu0 0
        %492 = vmatpush1.bf16.msra.mxu0 %v475
        %493 = vmatprep.subr.bf16.mxu0 0
        %494 = vmatpush1.bf16.msra.mxu0 %v476
        %495 = vmatprep.subr.bf16.mxu0 0
        %496 = vmatpush1.bf16.msra.mxu0 %v477
        %497 = vmatprep.subr.bf16.mxu0 0
        %498 = vmatpush1.bf16.msra.mxu0 %v478
        %499 = vmatprep.subr.bf16.mxu0 0
        %500 = vmatpush1.bf16.msra.mxu0 %v479
        %501 = vmatprep.subr.bf16.mxu0 0
        %502 = vmatpush1.bf16.msra.mxu0 %v480
        %503 = vmatprep.subr.bf16.mxu0 0
        %504 = vmatpush1.bf16.msra.mxu0 %v481
        %505 = vmatprep.subr.bf16.mxu0 0
        %506 = vmatpush1.bf16.msra.mxu0 %v482
        %507 = vmatprep.subr.bf16.mxu0 0
        %508 = vmatpush1.bf16.msra.mxu0 0
        %509 = vmatprep.subr.bf16.mxu0 0
        %510 = vmatpush1.bf16.msra.mxu0 0
        %511 = vmatprep.subr.bf16.mxu0 0
        %512 = vmatpush1.bf16.msra.mxu0 0
        %513 = vmatprep.subr.bf16.mxu0 0
        %514 = vmatpush1.bf16.msra.mxu0 0
        %515 = vmatprep.subr.bf16.mxu0 0
        %516 = vmatpush1.bf16.msra.mxu0 0
        %517 = vmatprep.subr.bf16.mxu0 0
        %518 = vmatpush1.bf16.msra.mxu0 0
        %519 = vmatprep.subr.bf16.mxu0 0
        %520 = vmatpush1.bf16.msra.mxu0 0
        %521 = vmatprep.subr.bf16.mxu0 0
        %522 = vmatpush1.bf16.msra.mxu0 0
        %523 = vmatprep.mubr.bf16.mxu0 0
        %524 = vmatmul.mubr.bf16.gmra.mrb[0].mxu0 %v442
        %v525 = vpop.f32.mrb[0].mxu0
        %v526 = vadd.f32 0.0, %v525
        %v527 = vpop.f32.mrb[0].mxu0
        %v528 = vpop.f32.mrb[0].mxu0
        %v529 = vpop.f32.mrb[0].mxu0
        %530 = vdwg.mxu0
        %v531 = vxor.u32 %v526, 2147483648
        %v532 = vmul.f32 %v531, 1.442695
        %v533 = vpow.pop %v532
        %v534 = vadd.f32 %v533, 1.0
        %v535 = vrcp.pop %v534
        %v536 = vmul.f32 1.0, %v535
        %537 = vrot.lane.b32.xlu0 %v536, 112
        %v538 = vpop.permute.xlu0 %537
        %539 = vrot.lane.b32.xlu0 %v526, 16
        %v540 = vpop.permute.xlu0 %539
        %541 = vrot.lane.b32.xlu0 %v536, 96
        %v542 = vpop.permute.xlu0 %541
        %v543 = vmul.f32 %v538, %v526
        %v544 = vadd.f32 %v543, %v540
        %v545 = vtanh.pop %v544
        %v546 = vsub.f32 1.0, %v542
        %v547 = vmul.f32 %v546, %v545
        %v548 = vmul.f32 %v542, %v438
        %v549 = vadd.f32 %v547, %v548
        %v550 = vsel %vm253, %v549, 0.0
        %s551 = smul.u32 %s17, 8
        %s552 = sadd.s32 %s551, %s433
        %p553 = scmp.lt.s32.totalorder %s552, 12
        %s554 = scalar_select %p553, 1, 0
        %v555 = vstv %s554
        %vm556 = vcmp.eq.s32.totalorder %v555, 1
        %v557 = vsel %vm556, %v550, %v438
        %s558 = scalar_lea.vmem [#allocation4], %s433
        %559 = vst [vmem:[%s558] sm:$0x1] %v557
      $region45: #{dqn_rnn_forward_seq.1} parent=35 // loop_footer
        %s437 = sadd.s32 1, %s433
      $region46: #{dqn_rnn_forward_seq.1} parent=35 // loop_footer_branch
        %432 = sbr.rel target = $region42
      $region47: #{dqn_rnn_forward_seq.1} parent=35 // loop_exit
        _
      %560 = vst [vmem:[#allocation2] sm:$0x1] %v438
      %561 = vst [vmem:[%s5] sm:$0x1] %v438
      %v562 = vld [vmem:[%s3 + $0x80] sm:$0xf]
      %v563 = vld [vmem:[%s3 + $0x84] sm:$0xf]
      %v564 = vld [vmem:[%s3 + $0x88] sm:$0xf]
      %v565 = vld [vmem:[%s3 + $0x8c] sm:$0xf]
      %v566 = vld [vmem:[%s3 + $0x90] sm:$0xf]
      %v567 = vld [vmem:[%s3 + $0x94] sm:$0xf]
      %v568 = vld [vmem:[%s3 + $0x98] sm:$0xf]
      %v569 = vld [vmem:[%s3 + $0x9c] sm:$0xf]
      %v570 = vld [vmem:[%s3 + $0xa0] sm:$0xf]
      %v571 = vld [vmem:[%s3 + $0xa4] sm:$0xf]
      %v572 = vld [vmem:[%s3 + $0xa8] sm:$0xf]
      %v573 = vld [vmem:[%s3 + $0xac] sm:$0xf]
      %v574 = vld [vmem:[%s3 + $0xb0] sm:$0xf]
      %v575 = vld [vmem:[%s3 + $0xb4] sm:$0xf]
      %v576 = vld [vmem:[%s3 + $0xb8] sm:$0xf]
      %v577 = vld [vmem:[%s3 + $0xbc] sm:$0xf]
      %v578 = vld [vmem:[%s3 + $0xc0] sm:$0xf]
      %v579 = vld [vmem:[%s3 + $0xc4] sm:$0xf]
      %v580 = vld [vmem:[%s3 + $0xc8] sm:$0xf]
      %v581 = vld [vmem:[%s3 + $0xcc] sm:$0xf]
      %v582 = vld [vmem:[%s3 + $0xd0] sm:$0xf]
      %v583 = vld [vmem:[%s3 + $0xd4] sm:$0xf]
      %v584 = vld [vmem:[%s3 + $0xd8] sm:$0xf]
      %v585 = vld [vmem:[%s3 + $0xdc] sm:$0xf]
      %v586 = vld [vmem:[%s3 + $0xe0] sm:$0xf]
      %v587 = vld [vmem:[%s3 + $0xe4] sm:$0xf]
      %v588 = vld [vmem:[%s3 + $0xe8] sm:$0xf]
      %v589 = vld [vmem:[%s3 + $0xec] sm:$0xf]
      %v590 = vld [vmem:[%s3 + $0xf0] sm:$0xf]
      %v591 = vld [vmem:[%s3 + $0xf4] sm:$0xf]
      %v592 = vld [vmem:[%s3 + $0xf8] sm:$0xf]
      %v593 = vld [vmem:[%s3 + $0xfc] sm:$0xf]
      %v594 = vld [vmem:[%s3 + $0x100] sm:$0x1]
      %v595 = vunpack.c.l.bf16 %v594
      %v596 = vlaneseq
      %v597 = vshrl.u32 %v596, 7
      %v598 = vsub.s32 0, %v597
      %v599 = vrot.slane %v595, %v598
      %v600 = vld [vmem:[#allocation4] sm:$0xff]
      %v601 = vpack.c.bf16 %v600, %v600
      %v618 = vunpack.c.l.b16 %v562
      %v619 = vunpack.c.l.b16 %v563
      %v620 = vunpack.c.l.b16 %v564
      %v621 = vunpack.c.l.b16 %v565
      %v622 = vunpack.c.l.b16 %v566
      %v623 = vunpack.c.l.b16 %v567
      %v624 = vunpack.c.l.b16 %v568
      %v625 = vunpack.c.l.b16 %v569
      %v626 = vunpack.c.l.b16 %v570
      %v627 = vunpack.c.l.b16 %v571
      %v628 = vunpack.c.l.b16 %v572
      %v629 = vunpack.c.l.b16 %v573
      %v630 = vunpack.c.l.b16 %v574
      %v631 = vunpack.c.l.b16 %v575
      %v632 = vunpack.c.l.b16 %v576
      %v633 = vunpack.c.l.b16 %v577
      %v634 = vpack.c.b16 %v619, %v618
      %v635 = vpack.c.b16 %v621, %v620
      %v636 = vpack.c.b16 %v623, %v622
      %v637 = vpack.c.b16 %v625, %v624
      %v638 = vpack.c.b16 %v627, %v626
      %v639 = vpack.c.b16 %v629, %v628
      %v640 = vpack.c.b16 %v631, %v630
      %v641 = vpack.c.b16 %v633, %v632
      %650 = vmatprep.subr.bf16.mxu0 0
      %651 = vmatpush1.bf16.msra.mxu0 %v634
      %652 = vmatprep.subr.bf16.mxu0 0
      %653 = vmatpush1.bf16.msra.mxu0 %v635
      %654 = vmatprep.subr.bf16.mxu0 0
      %655 = vmatpush1.bf16.msra.mxu0 %v636
      %656 = vmatprep.subr.bf16.mxu0 0
      %657 = vmatpush1.bf16.msra.mxu0 %v637
      %658 = vmatprep.subr.bf16.mxu0 0
      %659 = vmatpush1.bf16.msra.mxu0 %v638
      %660 = vmatprep.subr.bf16.mxu0 0
      %661 = vmatpush1.bf16.msra.mxu0 %v639
      %662 = vmatprep.subr.bf16.mxu0 0
      %663 = vmatpush1.bf16.msra.mxu0 %v640
      %664 = vmatprep.subr.bf16.mxu0 0
      %665 = vmatpush1.bf16.msra.mxu0 %v641
      %666 = vmatprep.subr.bf16.mxu0 0
      %667 = vmatpush1.bf16.msra.mxu0 0
      %668 = vmatprep.subr.bf16.mxu0 0
      %669 = vmatpush1.bf16.msra.mxu0 0
      %670 = vmatprep.subr.bf16.mxu0 0
      %671 = vmatpush1.bf16.msra.mxu0 0
      %672 = vmatprep.subr.bf16.mxu0 0
      %673 = vmatpush1.bf16.msra.mxu0 0
      %674 = vmatprep.subr.bf16.mxu0 0
      %675 = vmatpush1.bf16.msra.mxu0 0
      %676 = vmatprep.subr.bf16.mxu0 0
      %677 = vmatpush1.bf16.msra.mxu0 0
      %678 = vmatprep.subr.bf16.mxu0 0
      %679 = vmatpush1.bf16.msra.mxu0 0
      %680 = vmatprep.subr.bf16.mxu0 0
      %681 = vmatpush1.bf16.msra.mxu0 0
      %682 = vmatprep.mubr.bf16.mxu0 0
      %683 = vmatmul.mubr.bf16.gmra.mrb[0].mxu0 %v601
      %v684 = vpop.f32.mrb[0].mxu0
      %v685 = vadd.f32 0.0, %v684
      %v686 = vpop.f32.mrb[0].mxu0
      %v687 = vpop.f32.mrb[0].mxu0
      %v688 = vpop.f32.mrb[0].mxu0
      %689 = vdwg.mxu0
      %v690 = vld [vmem:[%s236] sm:$0x1]
      %v691 = vld [vmem:[%s236 + $0x8] sm:$0x1]
      %v692 = vld [vmem:[%s236 + $0x10] sm:$0x1]
      %v693 = vld [vmem:[%s236 + $0x18] sm:$0x1]
      %v694 = vld [vmem:[%s236 + $0x20] sm:$0x1]
      %v695 = vld [vmem:[%s236 + $0x28] sm:$0x1]
      %v696 = vld [vmem:[%s236 + $0x30] sm:$0x1]
      %v697 = vld [vmem:[%s236 + $0x38] sm:$0x1]
      %v698 = vpack.c.bf16 %v690, %v690
      %v699 = vpack.c.bf16 %v691, %v691
      %v700 = vpack.c.bf16 %v692, %v692
      %v701 = vpack.c.bf16 %v693, %v693
      %v702 = vpack.c.bf16 %v694, %v694
      %v703 = vpack.c.bf16 %v695, %v695
      %v704 = vpack.c.bf16 %v696, %v696
      %v705 = vpack.c.bf16 %v697, %v697
      %v714 = vunpack.c.l.b16 %v698
      %v715 = vunpack.c.l.b16 %v699
      %v716 = vunpack.c.l.b16 %v700
      %v717 = vunpack.c.l.b16 %v701
      %v718 = vunpack.c.l.b16 %v702
      %v719 = vunpack.c.l.b16 %v703
      %v720 = vunpack.c.l.b16 %v704
      %v721 = vunpack.c.l.b16 %v705
      %v722 = vrot.slane %v715, 7
      %v723 = vsel %vm303, %v722, %v714
      %v724 = vrot.slane %v716, 6
      %v725 = vsel %vm306, %v724, %v723
      %v726 = vrot.slane %v717, 5
      %v727 = vsel %vm309, %v726, %v725
      %v728 = vrot.slane %v718, 4
      %v729 = vsel %vm312, %v728, %v727
      %v730 = vrot.slane %v719, 3
      %v731 = vsel %vm315, %v730, %v729
      %v732 = vrot.slane %v720, 2
      %v733 = vsel %vm318, %v732, %v731
      %v734 = vrot.slane %v721, 1
      %v735 = vsel %vm321, %v734, %v733
      %v736 = vpack.c.b16 %v735, %v735
      %v754 = vunpack.c.l.b16 %v578
      %v755 = vunpack.c.l.b16 %v579
      %v756 = vunpack.c.l.b16 %v580
      %v757 = vunpack.c.l.b16 %v581
      %v758 = vunpack.c.l.b16 %v582
      %v759 = vunpack.c.l.b16 %v583
      %v760 = vunpack.c.l.b16 %v584
      %v761 = vunpack.c.l.b16 %v585
      %v762 = vunpack.c.l.b16 %v586
      %v763 = vunpack.c.l.b16 %v587
      %v764 = vunpack.c.l.b16 %v588
      %v765 = vunpack.c.l.b16 %v589
      %v766 = vunpack.c.l.b16 %v590
      %v767 = vunpack.c.l.b16 %v591
      %v768 = vunpack.c.l.b16 %v592
      %v769 = vunpack.c.l.b16 %v593
      %v770 = vpack.c.b16 %v755, %v754
      %v771 = vpack.c.b16 %v757, %v756
      %v772 = vpack.c.b16 %v759, %v758
      %v773 = vpack.c.b16 %v761, %v760
      %v774 = vpack.c.b16 %v763, %v762
      %v775 = vpack.c.b16 %v765, %v764
      %v776 = vpack.c.b16 %v767, %v766
      %v777 = vpack.c.b16 %v769, %v768
      %786 = vmatprep.subr.bf16.mxu0 0
      %787 = vmatpush1.bf16.msra.mxu0 %v770
      %788 = vmatprep.subr.bf16.mxu0 0
      %789 = vmatpush1.bf16.msra.mxu0 %v771
      %790 = vmatprep.subr.bf16.mxu0 0
      %791 = vmatpush1.bf16.msra.mxu0 %v772
      %792 = vmatprep.subr.bf16.mxu0 0
      %793 = vmatpush1.bf16.msra.mxu0 %v773
      %794 = vmatprep.subr.bf16.mxu0 0
      %795 = vmatpush1.bf16.msra.mxu0 %v774
      %796 = vmatprep.subr.bf16.mxu0 0
      %797 = vmatpush1.bf16.msra.mxu0 %v775
      %798 = vmatprep.subr.bf16.mxu0 0
      %799 = vmatpush1.bf16.msra.mxu0 %v776
      %800 = vmatprep.subr.bf16.mxu0 0
      %801 = vmatpush1.bf16.msra.mxu0 %v777
      %802 = vmatprep.subr.bf16.mxu0 0
      %803 = vmatpush1.bf16.msra.mxu0 0
      %804 = vmatprep.subr.bf16.mxu0 0
      %805 = vmatpush1.bf16.msra.mxu0 0
      %806 = vmatprep.subr.bf16.mxu0 0
      %807 = vmatpush1.bf16.msra.mxu0 0
      %808 = vmatprep.subr.bf16.mxu0 0
      %809 = vmatpush1.bf16.msra.mxu0 0
      %810 = vmatprep.subr.bf16.mxu0 0
      %811 = vmatpush1.bf16.msra.mxu0 0
      %812 = vmatprep.subr.bf16.mxu0 0
      %813 = vmatpush1.bf16.msra.mxu0 0
      %814 = vmatprep.subr.bf16.mxu0 0
      %815 = vmatpush1.bf16.msra.mxu0 0
      %816 = vmatprep.subr.bf16.mxu0 0
      %817 = vmatpush1.bf16.msra.mxu0 0
      %818 = vmatprep.mubr.bf16.mxu0 0
      %819 = vmatmul.mubr.bf16.gmra.mrb[0].mxu0 %v736
      %v820 = vpop.f32.mrb[0].mxu0
      %v821 = vadd.f32 0.0, %v820
      %v822 = vpop.f32.mrb[0].mxu0
      %v823 = vpop.f32.mrb[0].mxu0
      %v824 = vpop.f32.mrb[0].mxu0
      %825 = vdwg.mxu0
      %v826 = vadd.f32 %v685, %v821
      %v827 = vmax.f32 %v826, 0.0
      %v828 = vmul.f32 %v827, %v599
      %829 = vadd.xlane.f32.xlu0 %v828
      %v830 = vpop.xlane.xlu0 %829
      %vm831 = vcmp.eq.s32.totalorder %v250, 0
      %v832 = vsel %vm831, %v830, 0.0
      %v833 = vld [vmem:[%s236 + $0x1] sm:$0x1]
      %v834 = vld [vmem:[%s236 + $0x9] sm:$0x1]
      %v835 = vld [vmem:[%s236 + $0x11] sm:$0x1]
      %v836 = vld [vmem:[%s236 + $0x19] sm:$0x1]
      %v837 = vld [vmem:[%s236 + $0x21] sm:$0x1]
      %v838 = vld [vmem:[%s236 + $0x29] sm:$0x1]
      %v839 = vld [vmem:[%s236 + $0x31] sm:$0x1]
      %v840 = vld [vmem:[%s236 + $0x39] sm:$0x1]
      %v841 = vpack.c.bf16 %v833, %v833
      %v842 = vpack.c.bf16 %v834, %v834
      %v843 = vpack.c.bf16 %v835, %v835
      %v844 = vpack.c.bf16 %v836, %v836
      %v845 = vpack.c.bf16 %v837, %v837
      %v846 = vpack.c.bf16 %v838, %v838
      %v847 = vpack.c.bf16 %v839, %v839
      %v848 = vpack.c.bf16 %v840, %v840
      %v857 = vunpack.c.l.b16 %v841
      %v858 = vunpack.c.l.b16 %v842
      %v859 = vunpack.c.l.b16 %v843
      %v860 = vunpack.c.l.b16 %v844
      %v861 = vunpack.c.l.b16 %v845
      %v862 = vunpack.c.l.b16 %v846
      %v863 = vunpack.c.l.b16 %v847
      %v864 = vunpack.c.l.b16 %v848
      %v865 = vrot.slane %v858, 7
      %v866 = vsel %vm303, %v865, %v857
      %v867 = vrot.slane %v859, 6
      %v868 = vsel %vm306, %v867, %v866
      %v869 = vrot.slane %v860, 5
      %v870 = vsel %vm309, %v869, %v868
      %v871 = vrot.slane %v861, 4
      %v872 = vsel %vm312, %v871, %v870
      %v873 = vrot.slane %v862, 3
      %v874 = vsel %vm315, %v873, %v872
      %v875 = vrot.slane %v863, 2
      %v876 = vsel %vm318, %v875, %v874
      %v877 = vrot.slane %v864, 1
      %v878 = vsel %vm321, %v877, %v876
      %v879 = vpack.c.b16 %v878, %v878
      %881 = vmatprep.subr.bf16.mxu0 0
      %882 = vmatpush1.bf16.msra.mxu0 %v770
      %883 = vmatprep.subr.bf16.mxu0 0
      %884 = vmatpush1.bf16.msra.mxu0 %v771
      %885 = vmatprep.subr.bf16.mxu0 0
      %886 = vmatpush1.bf16.msra.mxu0 %v772
      %887 = vmatprep.subr.bf16.mxu0 0
      %888 = vmatpush1.bf16.msra.mxu0 %v773
      %889 = vmatprep.subr.bf16.mxu0 0
      %890 = vmatpush1.bf16.msra.mxu0 %v774
      %891 = vmatprep.subr.bf16.mxu0 0
      %892 = vmatpush1.bf16.msra.mxu0 %v775
      %893 = vmatprep.subr.bf16.mxu0 0
      %894 = vmatpush1.bf16.msra.mxu0 %v776
      %895 = vmatprep.subr.bf16.mxu0 0
      %896 = vmatpush1.bf16.msra.mxu0 %v777
      %897 = vmatprep.subr.bf16.mxu0 0
      %898 = vmatpush1.bf16.msra.mxu0 0
      %899 = vmatprep.subr.bf16.mxu0 0
      %900 = vmatpush1.bf16.msra.mxu0 0
      %901 = vmatprep.subr.bf16.mxu0 0
      %902 = vmatpush1.bf16.msra.mxu0 0
      %903 = vmatprep.subr.bf16.mxu0 0
      %904 = vmatpush1.bf16.msra.mxu0 0
      %905 = vmatprep.subr.bf16.mxu0 0
      %906 = vmatpush1.bf16.msra.mxu0 0
      %907 = vmatprep.subr.bf16.mxu0 0
      %908 = vmatpush1.bf16.msra.mxu0 0
      %909 = vmatprep.subr.bf16.mxu0 0
      %910 = vmatpush1.bf16.msra.mxu0 0
      %911 = vmatprep.subr.bf16.mxu0 0
      %912 = vmatpush1.bf16.msra.mxu0 0
      %913 = vmatprep.mubr.bf16.mxu0 0
      %914 = vmatmul.mubr.bf16.gmra.mrb[0].mxu0 %v879
      %v915 = vpop.f32.mrb[0].mxu0
      %v916 = vadd.f32 0.0, %v915
      %v917 = vpop.f32.mrb[0].mxu0
      %v918 = vpop.f32.mrb[0].mxu0
      %v919 = vpop.f32.mrb[0].mxu0
      %920 = vdwg.mxu0
      %v921 = vadd.f32 %v685, %v916
      %v922 = vmax.f32 %v921, 0.0
      %v923 = vmul.f32 %v922, %v599
      %924 = vadd.xlane.f32.xlu0 %v923
      %v925 = vpop.xlane.xlu0 %924
      %vm926 = vcmp.eq.s32.totalorder %v250, 1
      %v927 = vsel %vm926, %v925, %v832
      %v928 = vld [vmem:[%s236 + $0x2] sm:$0x1]
      %v929 = vld [vmem:[%s236 + $0xa] sm:$0x1]
      %v930 = vld [vmem:[%s236 + $0x12] sm:$0x1]
      %v931 = vld [vmem:[%s236 + $0x1a] sm:$0x1]
      %v932 = vld [vmem:[%s236 + $0x22] sm:$0x1]
      %v933 = vld [vmem:[%s236 + $0x2a] sm:$0x1]
      %v934 = vld [vmem:[%s236 + $0x32] sm:$0x1]
      %v935 = vld [vmem:[%s236 + $0x3a] sm:$0x1]
      %v936 = vpack.c.bf16 %v928, %v928
      %v937 = vpack.c.bf16 %v929, %v929
      %v938 = vpack.c.bf16 %v930, %v930
      %v939 = vpack.c.bf16 %v931, %v931
      %v940 = vpack.c.bf16 %v932, %v932
      %v941 = vpack.c.bf16 %v933, %v933
      %v942 = vpack.c.bf16 %v934, %v934
      %v943 = vpack.c.bf16 %v935, %v935
      %v952 = vunpack.c.l.b16 %v936
      %v953 = vunpack.c.l.b16 %v937
      %v954 = vunpack.c.l.b16 %v938
      %v955 = vunpack.c.l.b16 %v939
      %v956 = vunpack.c.l.b16 %v940
      %v957 = vunpack.c.l.b16 %v941
      %v958 = vunpack.c.l.b16 %v942
      %v959 = vunpack.c.l.b16 %v943
      %v960 = vrot.slane %v953, 7
      %v961 = vsel %vm303, %v960, %v952
      %v962 = vrot.slane %v954, 6
      %v963 = vsel %vm306, %v962, %v961
      %v964 = vrot.slane %v955, 5
      %v965 = vsel %vm309, %v964, %v963
      %v966 = vrot.slane %v956, 4
      %v967 = vsel %vm312, %v966, %v965
      %v968 = vrot.slane %v957, 3
      %v969 = vsel %vm315, %v968, %v967
      %v970 = vrot.slane %v958, 2
      %v971 = vsel %vm318, %v970, %v969
      %v972 = vrot.slane %v959, 1
      %v973 = vsel %vm321, %v972, %v971
      %v974 = vpack.c.b16 %v973, %v973
      %976 = vmatprep.subr.bf16.mxu0 0
      %977 = vmatpush1.bf16.msra.mxu0 %v770
      %978 = vmatprep.subr.bf16.mxu0 0
      %979 = vmatpush1.bf16.msra.mxu0 %v771
      %980 = vmatprep.subr.bf16.mxu0 0
      %981 = vmatpush1.bf16.msra.mxu0 %v772
      %982 = vmatprep.subr.bf16.mxu0 0
      %983 = vmatpush1.bf16.msra.mxu0 %v773
      %984 = vmatprep.subr.bf16.mxu0 0
      %985 = vmatpush1.bf16.msra.mxu0 %v774
      %986 = vmatprep.subr.bf16.mxu0 0
      %987 = vmatpush1.bf16.msra.mxu0 %v775
      %988 = vmatprep.subr.bf16.mxu0 0
      %989 = vmatpush1.bf16.msra.mxu0 %v776
      %990 = vmatprep.subr.bf16.mxu0 0
      %991 = vmatpush1.bf16.msra.mxu0 %v777
      %992 = vmatprep.subr.bf16.mxu0 0
      %993 = vmatpush1.bf16.msra.mxu0 0
      %994 = vmatprep.subr.bf16.mxu0 0
      %995 = vmatpush1.bf16.msra.mxu0 0
      %996 = vmatprep.subr.bf16.mxu0 0
      %997 = vmatpush1.bf16.msra.mxu0 0
      %998 = vmatprep.subr.bf16.mxu0 0
      %999 = vmatpush1.bf16.msra.mxu0 0
      %1000 = vmatprep.subr.bf16.mxu0 0
      %1001 = vmatpush1.bf16.msra.mxu0 0
      %1002 = vmatprep.subr.bf16.mxu0 0
      %1003 = vmatpush1.bf16.msra.mxu0 0
      %1004 = vmatprep.subr.bf16.mxu0 0
      %1005 = vmatpush1.bf16.msra.mxu0 0
      %1006 = vmatprep.subr.bf16.mxu0 0
      %1007 = vmatpush1.bf16.msra.mxu0 0
      %1008 = vmatprep.mubr.bf16.mxu0 0
      %1009 = vmatmul.mubr.bf16.gmra.mrb[0].mxu0 %v974
      %v1010 = vpop.f32.mrb[0].mxu0
      %v1011 = vadd.f32 0.0, %v1010
      %v1012 = vpop.f32.mrb[0].mxu0
      %v1013 = vpop.f32.mrb[0].mxu0
      %v1014 = vpop.f32.mrb[0].mxu0
      %1015 = vdwg.mxu0
      %v1016 = vadd.f32 %v685, %v1011
      %v1017 = vmax.f32 %v1016, 0.0
      %v1018 = vmul.f32 %v1017, %v599
      %1019 = vadd.xlane.f32.xlu0 %v1018
      %v1020 = vpop.xlane.xlu0 %1019
      %vm1021 = vcmp.eq.s32.totalorder %v250, 2
      %v1022 = vsel %vm1021, %v1020, %v927
      %v1023 = vld [vmem:[%s236 + $0x3] sm:$0x1]
      %v1024 = vld [vmem:[%s236 + $0xb] sm:$0x1]
      %v1025 = vld [vmem:[%s236 + $0x13] sm:$0x1]
      %v1026 = vld [vmem:[%s236 + $0x1b] sm:$0x1]
      %v1027 = vld [vmem:[%s236 + $0x23] sm:$0x1]
      %v1028 = vld [vmem:[%s236 + $0x2b] sm:$0x1]
      %v1029 = vld [vmem:[%s236 + $0x33] sm:$0x1]
      %v1030 = vld [vmem:[%s236 + $0x3b] sm:$0x1]
      %v1031 = vpack.c.bf16 %v1023, %v1023
      %v1032 = vpack.c.bf16 %v1024, %v1024
      %v1033 = vpack.c.bf16 %v1025, %v1025
      %v1034 = vpack.c.bf16 %v1026, %v1026
      %v1035 = vpack.c.bf16 %v1027, %v1027
      %v1036 = vpack.c.bf16 %v1028, %v1028
      %v1037 = vpack.c.bf16 %v1029, %v1029
      %v1038 = vpack.c.bf16 %v1030, %v1030
      %v1047 = vunpack.c.l.b16 %v1031
      %v1048 = vunpack.c.l.b16 %v1032
      %v1049 = vunpack.c.l.b16 %v1033
      %v1050 = vunpack.c.l.b16 %v1034
      %v1051 = vunpack.c.l.b16 %v1035
      %v1052 = vunpack.c.l.b16 %v1036
      %v1053 = vunpack.c.l.b16 %v1037
      %v1054 = vunpack.c.l.b16 %v1038
      %v1055 = vrot.slane %v1048, 7
      %v1056 = vsel %vm303, %v1055, %v1047
      %v1057 = vrot.slane %v1049, 6
      %v1058 = vsel %vm306, %v1057, %v1056
      %v1059 = vrot.slane %v1050, 5
      %v1060 = vsel %vm309, %v1059, %v1058
      %v1061 = vrot.slane %v1051, 4
      %v1062 = vsel %vm312, %v1061, %v1060
      %v1063 = vrot.slane %v1052, 3
      %v1064 = vsel %vm315, %v1063, %v1062
      %v1065 = vrot.slane %v1053, 2
      %v1066 = vsel %vm318, %v1065, %v1064
      %v1067 = vrot.slane %v1054, 1
      %v1068 = vsel %vm321, %v1067, %v1066
      %v1069 = vpack.c.b16 %v1068, %v1068
      %1071 = vmatprep.subr.bf16.mxu0 0
      %1072 = vmatpush1.bf16.msra.mxu0 %v770
      %1073 = vmatprep.subr.bf16.mxu0 0
      %1074 = vmatpush1.bf16.msra.mxu0 %v771
      %1075 = vmatprep.subr.bf16.mxu0 0
      %1076 = vmatpush1.bf16.msra.mxu0 %v772
      %1077 = vmatprep.subr.bf16.mxu0 0
      %1078 = vmatpush1.bf16.msra.mxu0 %v773
      %1079 = vmatprep.subr.bf16.mxu0 0
      %1080 = vmatpush1.bf16.msra.mxu0 %v774
      %1081 = vmatprep.subr.bf16.mxu0 0
      %1082 = vmatpush1.bf16.msra.mxu0 %v775
      %1083 = vmatprep.subr.bf16.mxu0 0
      %1084 = vmatpush1.bf16.msra.mxu0 %v776
      %1085 = vmatprep.subr.bf16.mxu0 0
      %1086 = vmatpush1.bf16.msra.mxu0 %v777
      %1087 = vmatprep.subr.bf16.mxu0 0
      %1088 = vmatpush1.bf16.msra.mxu0 0
      %1089 = vmatprep.subr.bf16.mxu0 0
      %1090 = vmatpush1.bf16.msra.mxu0 0
      %1091 = vmatprep.subr.bf16.mxu0 0
      %1092 = vmatpush1.bf16.msra.mxu0 0
      %1093 = vmatprep.subr.bf16.mxu0 0
      %1094 = vmatpush1.bf16.msra.mxu0 0
      %1095 = vmatprep.subr.bf16.mxu0 0
      %1096 = vmatpush1.bf16.msra.mxu0 0
      %1097 = vmatprep.subr.bf16.mxu0 0
      %1098 = vmatpush1.bf16.msra.mxu0 0
      %1099 = vmatprep.subr.bf16.mxu0 0
      %1100 = vmatpush1.bf16.msra.mxu0 0
      %1101 = vmatprep.subr.bf16.mxu0 0
      %1102 = vmatpush1.bf16.msra.mxu0 0
      %1103 = vmatprep.mubr.bf16.mxu0 0
      %1104 = vmatmul.mubr.bf16.gmra.mrb[0].mxu0 %v1069
      %v1105 = vpop.f32.mrb[0].mxu0
      %v1106 = vadd.f32 0.0, %v1105
      %v1107 = vpop.f32.mrb[0].mxu0
      %v1108 = vpop.f32.mrb[0].mxu0
      %v1109 = vpop.f32.mrb[0].mxu0
      %1110 = vdwg.mxu0
      %v1111 = vadd.f32 %v685, %v1106
      %v1112 = vmax.f32 %v1111, 0.0
      %v1113 = vmul.f32 %v1112, %v599
      %1114 = vadd.xlane.f32.xlu0 %v1113
      %v1115 = vpop.xlane.xlu0 %1114
      %vm1116 = vcmp.eq.s32.totalorder %v250, 3
      %v1117 = vsel %vm1116, %v1115, %v1022
      %v1118 = vld [vmem:[%s236 + $0x4] sm:$0x1]
      %v1119 = vld [vmem:[%s236 + $0xc] sm:$0x1]
      %v1120 = vld [vmem:[%s236 + $0x14] sm:$0x1]
      %v1121 = vld [vmem:[%s236 + $0x1c] sm:$0x1]
      %v1122 = vld [vmem:[%s236 + $0x24] sm:$0x1]
      %v1123 = vld [vmem:[%s236 + $0x2c] sm:$0x1]
      %v1124 = vld [vmem:[%s236 + $0x34] sm:$0x1]
      %v1125 = vld [vmem:[%s236 + $0x3c] sm:$0x1]
      %v1126 = vpack.c.bf16 %v1118, %v1118
      %v1127 = vpack.c.bf16 %v1119, %v1119
      %v1128 = vpack.c.bf16 %v1120, %v1120
      %v1129 = vpack.c.bf16 %v1121, %v1121
      %v1130 = vpack.c.bf16 %v1122, %v1122
      %v1131 = vpack.c.bf16 %v1123, %v1123
      %v1132 = vpack.c.bf16 %v1124, %v1124
      %v1133 = vpack.c.bf16 %v1125, %v1125
      %v1142 = vunpack.c.l.b16 %v1126
      %v1143 = vunpack.c.l.b16 %v1127
      %v1144 = vunpack.c.l.b16 %v1128
      %v1145 = vunpack.c.l.b16 %v1129
      %v1146 = vunpack.c.l.b16 %v1130
      %v1147 = vunpack.c.l.b16 %v1131
      %v1148 = vunpack.c.l.b16 %v1132
      %v1149 = vunpack.c.l.b16 %v1133
      %v1150 = vrot.slane %v1143, 7
      %v1151 = vsel %vm303, %v1150, %v1142
      %v1152 = vrot.slane %v1144, 6
      %v1153 = vsel %vm306, %v1152, %v1151
      %v1154 = vrot.slane %v1145, 5
      %v1155 = vsel %vm309, %v1154, %v1153
      %v1156 = vrot.slane %v1146, 4
      %v1157 = vsel %vm312, %v1156, %v1155
      %v1158 = vrot.slane %v1147, 3
      %v1159 = vsel %vm315, %v1158, %v1157
      %v1160 = vrot.slane %v1148, 2
      %v1161 = vsel %vm318, %v1160, %v1159
      %v1162 = vrot.slane %v1149, 1
      %v1163 = vsel %vm321, %v1162, %v1161
      %v1164 = vpack.c.b16 %v1163, %v1163
      %1166 = vmatprep.subr.bf16.mxu0 0
      %1167 = vmatpush1.bf16.msra.mxu0 %v770
      %1168 = vmatprep.subr.bf16.mxu0 0
      %1169 = vmatpush1.bf16.msra.mxu0 %v771
      %1170 = vmatprep.subr.bf16.mxu0 0
      %1171 = vmatpush1.bf16.msra.mxu0 %v772
      %1172 = vmatprep.subr.bf16.mxu0 0
      %1173 = vmatpush1.bf16.msra.mxu0 %v773
      %1174 = vmatprep.subr.bf16.mxu0 0
      %1175 = vmatpush1.bf16.msra.mxu0 %v774
      %1176 = vmatprep.subr.bf16.mxu0 0
      %1177 = vmatpush1.bf16.msra.mxu0 %v775
      %1178 = vmatprep.subr.bf16.mxu0 0
      %1179 = vmatpush1.bf16.msra.mxu0 %v776
      %1180 = vmatprep.subr.bf16.mxu0 0
      %1181 = vmatpush1.bf16.msra.mxu0 %v777
      %1182 = vmatprep.subr.bf16.mxu0 0
      %1183 = vmatpush1.bf16.msra.mxu0 0
      %1184 = vmatprep.subr.bf16.mxu0 0
      %1185 = vmatpush1.bf16.msra.mxu0 0
      %1186 = vmatprep.subr.bf16.mxu0 0
      %1187 = vmatpush1.bf16.msra.mxu0 0
      %1188 = vmatprep.subr.bf16.mxu0 0
      %1189 = vmatpush1.bf16.msra.mxu0 0
      %1190 = vmatprep.subr.bf16.mxu0 0
      %1191 = vmatpush1.bf16.msra.mxu0 0
      %1192 = vmatprep.subr.bf16.mxu0 0
      %1193 = vmatpush1.bf16.msra.mxu0 0
      %1194 = vmatprep.subr.bf16.mxu0 0
      %1195 = vmatpush1.bf16.msra.mxu0 0
      %1196 = vmatprep.subr.bf16.mxu0 0
      %1197 = vmatpush1.bf16.msra.mxu0 0
      %1198 = vmatprep.mubr.bf16.mxu0 0
      %1199 = vmatmul.mubr.bf16.gmra.mrb[0].mxu0 %v1164
      %v1200 = vpop.f32.mrb[0].mxu0
      %v1201 = vadd.f32 0.0, %v1200
      %v1202 = vpop.f32.mrb[0].mxu0
      %v1203 = vpop.f32.mrb[0].mxu0
      %v1204 = vpop.f32.mrb[0].mxu0
      %1205 = vdwg.mxu0
      %v1206 = vadd.f32 %v685, %v1201
      %v1207 = vmax.f32 %v1206, 0.0
      %v1208 = vmul.f32 %v1207, %v599
      %1209 = vadd.xlane.f32.xlu0 %v1208
      %v1210 = vpop.xlane.xlu0 %1209
      %vm1211 = vcmp.eq.s32.totalorder %v250, 4
      %v1212 = vsel %vm1211, %v1210, %v1117
      %v1213 = vld [vmem:[%s236 + $0x5] sm:$0x1]
      %v1214 = vld [vmem:[%s236 + $0xd] sm:$0x1]
      %v1215 = vld [vmem:[%s236 + $0x15] sm:$0x1]
      %v1216 = vld [vmem:[%s236 + $0x1d] sm:$0x1]
      %v1217 = vld [vmem:[%s236 + $0x25] sm:$0x1]
      %v1218 = vld [vmem:[%s236 + $0x2d] sm:$0x1]
      %v1219 = vld [vmem:[%s236 + $0x35] sm:$0x1]
      %v1220 = vld [vmem:[%s236 + $0x3d] sm:$0x1]
      %v1221 = vpack.c.bf16 %v1213, %v1213
      %v1222 = vpack.c.bf16 %v1214, %v1214
      %v1223 = vpack.c.bf16 %v1215, %v1215
      %v1224 = vpack.c.bf16 %v1216, %v1216
      %v1225 = vpack.c.bf16 %v1217, %v1217
      %v1226 = vpack.c.bf16 %v1218, %v1218
      %v1227 = vpack.c.bf16 %v1219, %v1219
      %v1228 = vpack.c.bf16 %v1220, %v1220
      %v1237 = vunpack.c.l.b16 %v1221
      %v1238 = vunpack.c.l.b16 %v1222
      %v1239 = vunpack.c.l.b16 %v1223
      %v1240 = vunpack.c.l.b16 %v1224
      %v1241 = vunpack.c.l.b16 %v1225
      %v1242 = vunpack.c.l.b16 %v1226
      %v1243 = vunpack.c.l.b16 %v1227
      %v1244 = vunpack.c.l.b16 %v1228
      %v1245 = vrot.slane %v1238, 7
      %v1246 = vsel %vm303, %v1245, %v1237
      %v1247 = vrot.slane %v1239, 6
      %v1248 = vsel %vm306, %v1247, %v1246
      %v1249 = vrot.slane %v1240, 5
      %v1250 = vsel %vm309, %v1249, %v1248
      %v1251 = vrot.slane %v1241, 4
      %v1252 = vsel %vm312, %v1251, %v1250
      %v1253 = vrot.slane %v1242, 3
      %v1254 = vsel %vm315, %v1253, %v1252
      %v1255 = vrot.slane %v1243, 2
      %v1256 = vsel %vm318, %v1255, %v1254
      %v1257 = vrot.slane %v1244, 1
      %v1258 = vsel %vm321, %v1257, %v1256
      %v1259 = vpack.c.b16 %v1258, %v1258
      %1261 = vmatprep.subr.bf16.mxu0 0
      %1262 = vmatpush1.bf16.msra.mxu0 %v770
      %1263 = vmatprep.subr.bf16.mxu0 0
      %1264 = vmatpush1.bf16.msra.mxu0 %v771
      %1265 = vmatprep.subr.bf16.mxu0 0
      %1266 = vmatpush1.bf16.msra.mxu0 %v772
      %1267 = vmatprep.subr.bf16.mxu0 0
      %1268 = vmatpush1.bf16.msra.mxu0 %v773
      %1269 = vmatprep.subr.bf16.mxu0 0
      %1270 = vmatpush1.bf16.msra.mxu0 %v774
      %1271 = vmatprep.subr.bf16.mxu0 0
      %1272 = vmatpush1.bf16.msra.mxu0 %v775
      %1273 = vmatprep.subr.bf16.mxu0 0
      %1274 = vmatpush1.bf16.msra.mxu0 %v776
      %1275 = vmatprep.subr.bf16.mxu0 0
      %1276 = vmatpush1.bf16.msra.mxu0 %v777
      %1277 = vmatprep.subr.bf16.mxu0 0
      %1278 = vmatpush1.bf16.msra.mxu0 0
      %1279 = vmatprep.subr.bf16.mxu0 0
      %1280 = vmatpush1.bf16.msra.mxu0 0
      %1281 = vmatprep.subr.bf16.mxu0 0
      %1282 = vmatpush1.bf16.msra.mxu0 0
      %1283 = vmatprep.subr.bf16.mxu0 0
      %1284 = vmatpush1.bf16.msra.mxu0 0
      %1285 = vmatprep.subr.bf16.mxu0 0
      %1286 = vmatpush1.bf16.msra.mxu0 0
      %1287 = vmatprep.subr.bf16.mxu0 0
      %1288 = vmatpush1.bf16.msra.mxu0 0
      %1289 = vmatprep.subr.bf16.mxu0 0
      %1290 = vmatpush1.bf16.msra.mxu0 0
      %1291 = vmatprep.subr.bf16.mxu0 0
      %1292 = vmatpush1.bf16.msra.mxu0 0
      %1293 = vmatprep.mubr.bf16.mxu0 0
      %1294 = vmatmul.mubr.bf16.gmra.mrb[0].mxu0 %v1259
      %v1295 = vpop.f32.mrb[0].mxu0
      %v1296 = vadd.f32 0.0, %v1295
      %v1297 = vpop.f32.mrb[0].mxu0
      %v1298 = vpop.f32.mrb[0].mxu0
      %v1299 = vpop.f32.mrb[0].mxu0
      %1300 = vdwg.mxu0
      %v1301 = vadd.f32 %v685, %v1296
      %v1302 = vmax.f32 %v1301, 0.0
      %v1303 = vmul.f32 %v1302, %v599
      %1304 = vadd.xlane.f32.xlu0 %v1303
      %v1305 = vpop.xlane.xlu0 %1304
      %vm1306 = vcmp.eq.s32.totalorder %v250, 5
      %v1307 = vsel %vm1306, %v1305, %v1212
      %v1308 = vld [vmem:[%s236 + $0x6] sm:$0x1]
      %v1309 = vld [vmem:[%s236 + $0xe] sm:$0x1]
      %v1310 = vld [vmem:[%s236 + $0x16] sm:$0x1]
      %v1311 = vld [vmem:[%s236 + $0x1e] sm:$0x1]
      %v1312 = vld [vmem:[%s236 + $0x26] sm:$0x1]
      %v1313 = vld [vmem:[%s236 + $0x2e] sm:$0x1]
      %v1314 = vld [vmem:[%s236 + $0x36] sm:$0x1]
      %v1315 = vld [vmem:[%s236 + $0x3e] sm:$0x1]
      %v1316 = vpack.c.bf16 %v1308, %v1308
      %v1317 = vpack.c.bf16 %v1309, %v1309
      %v1318 = vpack.c.bf16 %v1310, %v1310
      %v1319 = vpack.c.bf16 %v1311, %v1311
      %v1320 = vpack.c.bf16 %v1312, %v1312
      %v1321 = vpack.c.bf16 %v1313, %v1313
      %v1322 = vpack.c.bf16 %v1314, %v1314
      %v1323 = vpack.c.bf16 %v1315, %v1315
      %v1332 = vunpack.c.l.b16 %v1316
      %v1333 = vunpack.c.l.b16 %v1317
      %v1334 = vunpack.c.l.b16 %v1318
      %v1335 = vunpack.c.l.b16 %v1319
      %v1336 = vunpack.c.l.b16 %v1320
      %v1337 = vunpack.c.l.b16 %v1321
      %v1338 = vunpack.c.l.b16 %v1322
      %v1339 = vunpack.c.l.b16 %v1323
      %v1340 = vrot.slane %v1333, 7
      %v1341 = vsel %vm303, %v1340, %v1332
      %v1342 = vrot.slane %v1334, 6
      %v1343 = vsel %vm306, %v1342, %v1341
      %v1344 = vrot.slane %v1335, 5
      %v1345 = vsel %vm309, %v1344, %v1343
      %v1346 = vrot.slane %v1336, 4
      %v1347 = vsel %vm312, %v1346, %v1345
      %v1348 = vrot.slane %v1337, 3
      %v1349 = vsel %vm315, %v1348, %v1347
      %v1350 = vrot.slane %v1338, 2
      %v1351 = vsel %vm318, %v1350, %v1349
      %v1352 = vrot.slane %v1339, 1
      %v1353 = vsel %vm321, %v1352, %v1351
      %v1354 = vpack.c.b16 %v1353, %v1353
      %1356 = vmatprep.subr.bf16.mxu0 0
      %1357 = vmatpush1.bf16.msra.mxu0 %v770
      %1358 = vmatprep.subr.bf16.mxu0 0
      %1359 = vmatpush1.bf16.msra.mxu0 %v771
      %1360 = vmatprep.subr.bf16.mxu0 0
      %1361 = vmatpush1.bf16.msra.mxu0 %v772
      %1362 = vmatprep.subr.bf16.mxu0 0
      %1363 = vmatpush1.bf16.msra.mxu0 %v773
      %1364 = vmatprep.subr.bf16.mxu0 0
      %1365 = vmatpush1.bf16.msra.mxu0 %v774
      %1366 = vmatprep.subr.bf16.mxu0 0
      %1367 = vmatpush1.bf16.msra.mxu0 %v775
      %1368 = vmatprep.subr.bf16.mxu0 0
      %1369 = vmatpush1.bf16.msra.mxu0 %v776
      %1370 = vmatprep.subr.bf16.mxu0 0
      %1371 = vmatpush1.bf16.msra.mxu0 %v777
      %1372 = vmatprep.subr.bf16.mxu0 0
      %1373 = vmatpush1.bf16.msra.mxu0 0
      %1374 = vmatprep.subr.bf16.mxu0 0
      %1375 = vmatpush1.bf16.msra.mxu0 0
      %1376 = vmatprep.subr.bf16.mxu0 0
      %1377 = vmatpush1.bf16.msra.mxu0 0
      %1378 = vmatprep.subr.bf16.mxu0 0
      %1379 = vmatpush1.bf16.msra.mxu0 0
      %1380 = vmatprep.subr.bf16.mxu0 0
      %1381 = vmatpush1.bf16.msra.mxu0 0
      %1382 = vmatprep.subr.bf16.mxu0 0
      %1383 = vmatpush1.bf16.msra.mxu0 0
      %1384 = vmatprep.subr.bf16.mxu0 0
      %1385 = vmatpush1.bf16.msra.mxu0 0
      %1386 = vmatprep.subr.bf16.mxu0 0
      %1387 = vmatpush1.bf16.msra.mxu0 0
      %1388 = vmatprep.mubr.bf16.mxu0 0
      %1389 = vmatmul.mubr.bf16.gmra.mrb[0].mxu0 %v1354
      %v1390 = vpop.f32.mrb[0].mxu0
      %v1391 = vadd.f32 0.0, %v1390
      %v1392 = vpop.f32.mrb[0].mxu0
      %v1393 = vpop.f32.mrb[0].mxu0
      %v1394 = vpop.f32.mrb[0].mxu0
      %1395 = vdwg.mxu0
      %v1396 = vadd.f32 %v685, %v1391
      %v1397 = vmax.f32 %v1396, 0.0
      %v1398 = vmul.f32 %v1397, %v599
      %1399 = vadd.xlane.f32.xlu0 %v1398
      %v1400 = vpop.xlane.xlu0 %1399
      %vm1401 = vcmp.eq.s32.totalorder %v250, 6
      %v1402 = vsel %vm1401, %v1400, %v1307
      %v1403 = vld [vmem:[%s236 + $0x7] sm:$0x1]
      %v1404 = vld [vmem:[%s236 + $0xf] sm:$0x1]
      %v1405 = vld [vmem:[%s236 + $0x17] sm:$0x1]
      %v1406 = vld [vmem:[%s236 + $0x1f] sm:$0x1]
      %v1407 = vld [vmem:[%s236 + $0x27] sm:$0x1]
      %v1408 = vld [vmem:[%s236 + $0x2f] sm:$0x1]
      %v1409 = vld [vmem:[%s236 + $0x37] sm:$0x1]
      %v1410 = vld [vmem:[%s236 + $0x3f] sm:$0x1]
      %v1411 = vpack.c.bf16 %v1403, %v1403
      %v1412 = vpack.c.bf16 %v1404, %v1404
      %v1413 = vpack.c.bf16 %v1405, %v1405
      %v1414 = vpack.c.bf16 %v1406, %v1406
      %v1415 = vpack.c.bf16 %v1407, %v1407
      %v1416 = vpack.c.bf16 %v1408, %v1408
      %v1417 = vpack.c.bf16 %v1409, %v1409
      %v1418 = vpack.c.bf16 %v1410, %v1410
      %v1427 = vunpack.c.l.b16 %v1411
      %v1428 = vunpack.c.l.b16 %v1412
      %v1429 = vunpack.c.l.b16 %v1413
      %v1430 = vunpack.c.l.b16 %v1414
      %v1431 = vunpack.c.l.b16 %v1415
      %v1432 = vunpack.c.l.b16 %v1416
      %v1433 = vunpack.c.l.b16 %v1417
      %v1434 = vunpack.c.l.b16 %v1418
      %v1435 = vrot.slane %v1428, 7
      %v1436 = vsel %vm303, %v1435, %v1427
      %v1437 = vrot.slane %v1429, 6
      %v1438 = vsel %vm306, %v1437, %v1436
      %v1439 = vrot.slane %v1430, 5
      %v1440 = vsel %vm309, %v1439, %v1438
      %v1441 = vrot.slane %v1431, 4
      %v1442 = vsel %vm312, %v1441, %v1440
      %v1443 = vrot.slane %v1432, 3
      %v1444 = vsel %vm315, %v1443, %v1442
      %v1445 = vrot.slane %v1433, 2
      %v1446 = vsel %vm318, %v1445, %v1444
      %v1447 = vrot.slane %v1434, 1
      %v1448 = vsel %vm321, %v1447, %v1446
      %v1449 = vpack.c.b16 %v1448, %v1448
      %1451 = vmatprep.subr.bf16.mxu0 0
      %1452 = vmatpush1.bf16.msra.mxu0 %v770
      %1453 = vmatprep.subr.bf16.mxu0 0
      %1454 = vmatpush1.bf16.msra.mxu0 %v771
      %1455 = vmatprep.subr.bf16.mxu0 0
      %1456 = vmatpush1.bf16.msra.mxu0 %v772
      %1457 = vmatprep.subr.bf16.mxu0 0
      %1458 = vmatpush1.bf16.msra.mxu0 %v773
      %1459 = vmatprep.subr.bf16.mxu0 0
      %1460 = vmatpush1.bf16.msra.mxu0 %v774
      %1461 = vmatprep.subr.bf16.mxu0 0
      %1462 = vmatpush1.bf16.msra.mxu0 %v775
      %1463 = vmatprep.subr.bf16.mxu0 0
      %1464 = vmatpush1.bf16.msra.mxu0 %v776
      %1465 = vmatprep.subr.bf16.mxu0 0
      %1466 = vmatpush1.bf16.msra.mxu0 %v777
      %1467 = vmatprep.subr.bf16.mxu0 0
      %1468 = vmatpush1.bf16.msra.mxu0 0
      %1469 = vmatprep.subr.bf16.mxu0 0
      %1470 = vmatpush1.bf16.msra.mxu0 0
      %1471 = vmatprep.subr.bf16.mxu0 0
      %1472 = vmatpush1.bf16.msra.mxu0 0
      %1473 = vmatprep.subr.bf16.mxu0 0
      %1474 = vmatpush1.bf16.msra.mxu0 0
      %1475 = vmatprep.subr.bf16.mxu0 0
      %1476 = vmatpush1.bf16.msra.mxu0 0
      %1477 = vmatprep.subr.bf16.mxu0 0
      %1478 = vmatpush1.bf16.msra.mxu0 0
      %1479 = vmatprep.subr.bf16.mxu0 0
      %1480 = vmatpush1.bf16.msra.mxu0 0
      %1481 = vmatprep.subr.bf16.mxu0 0
      %1482 = vmatpush1.bf16.msra.mxu0 0
      %1483 = vmatprep.mubr.bf16.mxu0 0
      %1484 = vmatmul.mubr.bf16.gmra.mrb[0].mxu0 %v1449
      %v1485 = vpop.f32.mrb[0].mxu0
      %v1486 = vadd.f32 0.0, %v1485
      %v1487 = vpop.f32.mrb[0].mxu0
      %v1488 = vpop.f32.mrb[0].mxu0
      %v1489 = vpop.f32.mrb[0].mxu0
      %1490 = vdwg.mxu0
      %v1491 = vadd.f32 %v685, %v1486
      %v1492 = vmax.f32 %v1491, 0.0
      %v1493 = vmul.f32 %v1492, %v599
      %1494 = vadd.xlane.f32.xlu0 %v1493
      %v1495 = vpop.xlane.xlu0 %1494
      %vm1496 = vcmp.eq.s32.totalorder %v250, 7
      %v1497 = vsel %vm1496, %v1495, %v1402
      %vm1498 = vcmask 64512
      %1499 = vst.msk [vmem:[%s241] sm:$0xff] %vm1498, %v1497
      %p1500 = scmp.lt.s32.totalorder %s17, 1
      %s1501 = scalar_select %p1500, %s17, 1
      %s1502 = smul.addr %s1501, 8
      %s1503 = scalar_lea.vmem %s4, %s1502
      // Predicated region
      $region48: #{dqn_rnn_forward_seq.1} parent=35 // pred_check
        %p1504 = pneg %p129
      $region49: #{dqn_rnn_forward_seq.1} parent=35 // pred_check_branch
        %1506 = sbr.rel (%p1504) target = $region51
      $region50: #{dqn_rnn_forward_seq.1} parent=35 // pred_region
        _
      $region51: #{dqn_rnn_forward_seq.1} parent=35 // pred_fallthru
        _
      // Predicated region
      $region52: #{dqn_rnn_forward_seq.1} parent=35 // pred_check
        %p1507 = pneg %p150
      $region53: #{dqn_rnn_forward_seq.1} parent=35 // pred_check_branch
        %1509 = sbr.rel (%p1507) target = $region55
      $region54: #{dqn_rnn_forward_seq.1} parent=35 // pred_region
        _
      $region55: #{dqn_rnn_forward_seq.1} parent=35 // pred_fallthru
        _
      // Predicated region
      $region56: #{dqn_rnn_forward_seq.1} parent=35 // pred_check
        %p1510 = pneg %p150
      $region57: #{dqn_rnn_forward_seq.1} parent=35 // pred_check_branch
        %1512 = sbr.rel (%p1510) target = $region59
      $region58: #{dqn_rnn_forward_seq.1} parent=35 // pred_region
        _
      $region59: #{dqn_rnn_forward_seq.1} parent=35 // pred_fallthru
        _
    $region36: #{dqn_rnn_forward_seq.1} parent=5 // pred_fallthru
      _
    %p1513 = scmp.le.s32.totalorder 2, %s12
    // Predicated region
    $region60: #{dqn_rnn_forward_seq.1} parent=5 // pred_check
      %p1514 = pneg %p1513
    $region61: #{dqn_rnn_forward_seq.1} parent=5 // pred_check_branch
      %1516 = sbr.rel (%p1514) target = $region63
    $region62: #{dqn_rnn_forward_seq.1} parent=5 // pred_region
      %s1517 = ssub.s32 %s12, 2
      // Predicated region
      $region64: #{dqn_rnn_forward_seq.1} parent=62 // pred_check
        %p1518 = pneg %p135
      $region65: #{dqn_rnn_forward_seq.1} parent=62 // pred_check_branch
        %1520 = sbr.rel (%p1518) target = $region67
      $region66: #{dqn_rnn_forward_seq.1} parent=62 // pred_region
        %p1521 = scmp.lt.s32.totalorder %s18, 1
        %s1522 = scalar_select %p1521, %s18, 1
        %s1523 = smul.addr %s1522, 8
        %s1524 = scalar_lea.vmem %s4, %s1523
      $region67: #{dqn_rnn_forward_seq.1} parent=62 // pred_fallthru
        _
    $region63: #{dqn_rnn_forward_seq.1} parent=5 // pred_fallthru
      _
  $region6: #{dqn_rnn_forward_seq.1} parent=0 // loop_footer
    %s16 = sadd.s32 1, %s12
  $region7: #{dqn_rnn_forward_seq.1} parent=0 // loop_footer_branch
    %11 = sbr.rel target = $region3
  $region8: #{dqn_rnn_forward_seq.1} parent=0 // loop_exit
    _

</llo_original>
